<compile_context>
chip_gen: v7x
topology: tpu7x:2x2x1
jax: 0.10.0
libtpu: 0.0.40
codegen_flags: <defaults>
</compile_context>

<pallas_src>
import functools

import numpy as np

import jax
import jax.numpy as jnp
from jax import lax
from jax.experimental import pallas as pl
from jax.experimental.pallas import tpu as pltpu


def _round8(c):
    return ((c + 7) // 8) * 8


# ----------------------------------------------------------------------------
# Fused kernel
# ----------------------------------------------------------------------------
def _conv_sequence_kernel(x_ref, w0_ref, wr_ref, s_ref, b_ref,
                          m16_ref, m8_ref, sel_ref, o_ref,
                          buf_a, buf_b, cols0, colsr,
                          *, Cin, Cout, H, W):
    """One image: conv+BN -> maxpool(3x3,s2,p1) -> res1 -> res2.

    x_ref  : (1, Cin, H*W)          lane-dense input image
    w0_ref : (Cout, 9*Cin_p)        im2col conv weights (channel-padded)
    wr_ref : (4, Cout, 9*Cout_p)    residual conv weights (r1c1,r1c2,r2c1,r2c2)
    s_ref  : (5, Cout, 1)           folded BN scales
    b_ref  : (5, Cout, 1)           folded BN biases (include conv bias)
    m16_ref: (1, (H+2)*(W+2))       interior mask of the padded 16x16 plane
    m8_ref : (1, (H/2+2)*(W/2+2))   interior mask of the padded 8x8 plane
    sel_ref: (L16, L8)              0/1 pool-subsample selection matrix
    o_ref  : (1, Cout, (H/2)*(W/2)) output (NC(HW) == NCHW row-major)
    """
    H2, W2 = H // 2, W // 2
    Wp = W + 2
    L = (H + 2) * Wp
    Wp2 = W2 + 2
    L2 = (H2 + 2) * Wp2
    OFF = Wp + 1                     # margin: every centered tap slice fits
    OFF2 = Wp2 + 1
    Cin_p = _round8(Cin)
    Cout_p = _round8(Cout)
    taps = [(kh, kw) for kh in range(3) for kw in range(3)]
    NEG = jnp.float32(-1e30)

    # Zero staging / im2col buffers: the padded ring must read exactly 0 and
    # channel-pad rows (multiplied by zero weights) must not hold NaN garbage.
    buf_a[...] = jnp.zeros(buf_a.shape, jnp.float32)
    buf_b[...] = jnp.zeros(buf_b.shape, jnp.float32)
    cols0[...] = jnp.zeros(cols0.shape, jnp.float32)
    colsr[...] = jnp.zeros(colsr.shape, jnp.float32)

    interior16 = m16_ref[...] > 0.0          # (1, L)
    interior8 = m8_ref[...] > 0.0            # (1, L2)

    # ---- stage input into the padded-flat 16x16 plane (in-kernel padding) ---
    x = x_ref[0]                             # (Cin, H*W), lane-dense
    for i in range(H):
        dst = OFF + (i + 1) * Wp + 1
        buf_a[0:Cin, dst:dst + W] = x[:, i * W:(i + 1) * W]

    # ---- conv0 (Cin -> Cout) + folded BN: one (Cout,9Cp)x(9Cp,L) matmul -----
    for t, (kh, kw) in enumerate(taps):
        st = OFF + (kh - 1) * Wp + (kw - 1)
        cols0[t * Cin_p:t * Cin_p + Cin, :] = buf_a[0:Cin, st:st + L]
    y0 = jnp.dot(w0_ref[...], cols0[...], preferred_element_type=jnp.float32)
    y0 = y0 * s_ref[0] + b_ref[0]            # (Cout, L)

    # ---- max pool 3x3, stride 2, pad 1 --------------------------------------
    pool_in = jnp.where(interior16, y0, NEG)       # ring acts as -inf padding
    buf_a[0:Cout, OFF:OFF + L] = pool_in
    m3 = None
    for kh, kw in taps:
        st = OFF + (kh - 1) * Wp + (kw - 1)
        sl = buf_a[0:Cout, st:st + L]
        m3 = sl if m3 is None else jnp.maximum(m3, sl)
    # stride-2 gather + re-embed into the padded 8x8 plane (zero ring): the
    # selection matrix has a single 1 per valid column, so this is exact.
    a1 = jnp.dot(m3, sel_ref[...], preferred_element_type=jnp.float32)  # (Cout, L2)

    # ---- residual conv: relu -> conv3x3 -> folded BN, in padded-flat 8x8 ----
    def res_conv(a, w_mat, s, b):
        r = jnp.maximum(a, 0.0)                    # zero ring stays zero
        buf_b[:, OFF2:OFF2 + L2] = r
        for t, (kh, kw) in enumerate(taps):
            st = OFF2 + (kh - 1) * Wp2 + (kw - 1)
            colsr[t * Cout_p:t * Cout_p + Cout, :] = buf_b[:, st:st + L2]
        y = jnp.dot(w_mat, colsr[...], preferred_element_type=jnp.float32)
        y = y * s + b
        return jnp.where(interior8, y, 0.0)        # restore the zero padding

    h = res_conv(a1, wr_ref[0], s_ref[1], b_ref[1])
    a2 = res_conv(h, wr_ref[1], s_ref[2], b_ref[2]) + a1
    h = res_conv(a2, wr_ref[2], s_ref[3], b_ref[3])
    a3 = res_conv(h, wr_ref[3], s_ref[4], b_ref[4]) + a2

    # ---- write the interior back out; (N, Cout, H2*W2) is NCHW row-major ----
    for i in range(H2):
        src = (i + 1) * Wp2 + 1
        o_ref[0, :, i * W2:(i + 1) * W2] = a3[:, src:src + W2]


# ----------------------------------------------------------------------------
# Wrapper
# ----------------------------------------------------------------------------
def _pool_constants(H, W):
    """Interior masks + stride-2 pool selection matrix (built once, constant)."""
    H2, W2 = H // 2, W // 2
    Wp, L = W + 2, (H + 2) * (W + 2)
    Wp2, L2 = W2 + 2, (H2 + 2) * (W2 + 2)
    m16 = np.zeros((1, L), np.float32)
    for r in range(1, H + 1):
        m16[0, r * Wp + 1:r * Wp + 1 + W] = 1.0
    m8 = np.zeros((1, L2), np.float32)
    for r in range(1, H2 + 1):
        m8[0, r * Wp2 + 1:r * Wp2 + 1 + W2] = 1.0
    sel = np.zeros((L, L2), np.float32)
    for oi in range(H2):
        for oj in range(W2):
            p = (2 * oi + 1) * Wp + (2 * oj + 1)    # centered 3x3 window
            q = (oi + 1) * Wp2 + (oj + 1)           # interior of padded 8x8
            sel[p, q] = 1.0
    return jnp.asarray(m16), jnp.asarray(m8), jnp.asarray(sel)


def _im2col_weight(w_hwio, c_pad):
    """(3,3,Cin,Cout) HWIO -> (Cout, 9*c_pad) with row index (kh*3+kw)*c_pad+ci."""
    kh, kw, cin, cout = w_hwio.shape
    wt = jnp.transpose(w_hwio, (3, 0, 1, 2)).reshape(cout, kh * kw, cin)
    wt = jnp.pad(wt, ((0, 0), (0, 0), (0, c_pad - cin)))
    return wt.reshape(cout, kh * kw * c_pad)


def conv_sequence_forward(x_nchw, p):
    """ConvSequence.forward.  Input/output NCHW (PyTorch convention)."""
    N, Cin, H, W = x_nchw.shape
    Cout = p["conv"]["w"].shape[-1]
    assert H % 2 == 0 and W % 2 == 0
    H2, W2 = H // 2, W // 2
    Wp, Wp2 = W + 2, W2 + 2
    L, L2 = (H + 2) * Wp, (H2 + 2) * Wp2
    Cin_p, Cout_p = _round8(Cin), _round8(Cout)
    Cb = max(Cin, Cout)

    m16, m8, sel = _pool_constants(H, W)

    w0p = _im2col_weight(p["conv"]["w"], Cin_p)
    wrp = jnp.stack([_im2col_weight(p[k]["w"], Cout_p)
                     for k in ("r1c1", "r1c2", "r2c1", "r2c2")])
    order = ("conv", "r1c1", "r1c2", "r2c1", "r2c2")
    scales = jnp.stack([p[k]["s"] for k in order]).reshape(5, Cout, 1)
    biases = jnp.stack([p[k]["b"] for k in order]).reshape(5, Cout, 1)
    scales = scales.astype(jnp.float32)
    biases = biases.astype(jnp.float32)

    x_flat = x_nchw.reshape(N, Cin, H * W).astype(jnp.float32)

    kernel = functools.partial(_conv_sequence_kernel,
                               Cin=Cin, Cout=Cout, H=H, W=W)

    out_flat = pl.pallas_call(
        kernel,
        out_shape=jax.ShapeDtypeStruct((N, Cout, H2 * W2), jnp.float32),
        grid=(N,),
        in_specs=[
            pl.BlockSpec((1, Cin, H * W), lambda n: (n, 0, 0)),
            pl.BlockSpec((Cout, 9 * Cin_p), lambda n: (0, 0)),
            pl.BlockSpec((4, Cout, 9 * Cout_p), lambda n: (0, 0, 0)),
            pl.BlockSpec((5, Cout, 1), lambda n: (0, 0, 0)),
            pl.BlockSpec((5, Cout, 1), lambda n: (0, 0, 0)),
            pl.BlockSpec((1, L), lambda n: (0, 0)),
            pl.BlockSpec((1, L2), lambda n: (0, 0)),
            pl.BlockSpec((L, L2), lambda n: (0, 0)),
        ],
        out_specs=pl.BlockSpec((1, Cout, H2 * W2), lambda n: (n, 0, 0)),
        scratch_shapes=[
            pltpu.VMEM((Cb, L + 2 * (Wp + 1)), jnp.float32),     # padded 16x16 stage
            pltpu.VMEM((Cout, L2 + 2 * (Wp2 + 1)), jnp.float32),  # padded 8x8 stage
            pltpu.VMEM((9 * Cin_p, L), jnp.float32),              # conv0 im2col
            pltpu.VMEM((9 * Cout_p, L2), jnp.float32),            # residual im2col
        ],
        compiler_params=pltpu.CompilerParams(
            dimension_semantics=("parallel",),
            vmem_limit_bytes=32 * 1024 * 1024),
    )(x_flat, w0p, wrp, scales, biases, m16, m8, sel)

    return out_flat.reshape(N, Cout, H2, W2)          # already NCHW row-major


def fold_bn(conv_bias, gamma, beta, mean, var, eps=1e-5):
    scale = gamma / jnp.sqrt(var + eps)
    bias = scale * (conv_bias - mean) + beta
    return scale, bias


# ----------------------------------------------------------------------------
# Pure-JAX reference (for correctness check)
# ----------------------------------------------------------------------------
def _ref_conv_bn(x, w, s, b, input_relu=False, skip=None):
    if input_relu:
        x = jnp.maximum(x, 0.0)
    y = lax.conv_general_dilated(x, w, (1, 1), ((1, 1), (1, 1)),
                                 dimension_numbers=("NHWC", "HWIO", "NHWC"))
    y = y * s.reshape(1, 1, 1, -1) + b.reshape(1, 1, 1, -1)
    if skip is not None:
        y = y + skip
    return y


def _ref_maxpool(x):
    return lax.reduce_window(x, -jnp.inf, lax.max,
                             (1, 3, 3, 1), (1, 2, 2, 1),
                             ((0, 0), (1, 1), (1, 1), (0, 0)))


def reference_forward(x_nchw, p):
    x = jnp.transpose(x_nchw, (0, 2, 3, 1)).astype(jnp.float32)
    x = _ref_conv_bn(x, p["conv"]["w"], p["conv"]["s"], p["conv"]["b"])
    x = _ref_maxpool(x)
    h = _ref_conv_bn(x, p["r1c1"]["w"], p["r1c1"]["s"], p["r1c1"]["b"], True)
    x = _ref_conv_bn(h, p["r1c2"]["w"], p["r1c2"]["s"], p["r1c2"]["b"], True, x)
    h = _ref_conv_bn(x, p["r2c1"]["w"], p["r2c1"]["s"], p["r2c1"]["b"], True)
    x = _ref_conv_bn(h, p["r2c2"]["w"], p["r2c2"]["s"], p["r2c2"]["b"], True, x)
    return jnp.transpose(x, (0, 3, 1, 2))


# ----------------------------------------------------------------------------
# Deterministic parameter construction
# ----------------------------------------------------------------------------
def make_conv_bn_params(key, cin, cout):
    kw_, kb, kg, kbe, km, kv = jax.random.split(key, 6)
    w = 0.1 * jax.random.normal(kw_, (3, 3, cin, cout), jnp.float32)   # HWIO
    conv_b = 0.05 * jax.random.normal(kb, (cout,), jnp.float32)
    gamma = 1.0 + 0.1 * jax.random.normal(kg, (cout,), jnp.float32)
    beta = 0.05 * jax.random.normal(kbe, (cout,), jnp.float32)
    mean = 0.05 * jax.random.normal(km, (cout,), jnp.float32)
    var = 0.5 + jax.random.uniform(kv, (cout,), jnp.float32)
    s, b = fold_bn(conv_b, gamma, beta, mean, var)
    return {"w": w, "s": s, "b": b}


def make_params(key, input_depth, output_depth):
    keys = jax.random.split(key, 5)
    return {
        "conv": make_conv_bn_params(keys[0], input_depth, output_depth),
        "r1c1": make_conv_bn_params(keys[1], output_depth, output_depth),
        "r1c2": make_conv_bn_params(keys[2], output_depth, output_depth),
        "r2c1": make_conv_bn_params(keys[3], output_depth, output_depth),
        "r2c2": make_conv_bn_params(keys[4], output_depth, output_depth),
    }


# ----------------------------------------------------------------------------
if __name__ == "__main__":
    N, Cin, H, W = 2, 4, 16, 16          # small NCHW input
    Cout = 8

    root = jax.random.PRNGKey(0)
    kx, kp = jax.random.split(root)
    x_nchw = jax.random.normal(kx, (N, Cin, H, W), jnp.float32)
    params = make_params(kp, Cin, Cout)

    out = jax.jit(conv_sequence_forward)(x_nchw, params)
    out = jax.block_until_ready(out)

    ref = jax.block_until_ready(reference_forward(x_nchw, params))
    assert out.shape == (N, Cout, H // 2, W // 2), out.shape
    assert jnp.allclose(out, ref, rtol=1e-4, atol=1e-4), \
        float(jnp.max(jnp.abs(out - ref)))

    print("KERNEL_OK")
</pallas_src>

<mosaic_0001>
module attributes {stable_mosaic.version = 11 : i64} {
  func.func @_conv_sequence_kernel(%arg0: i32, %arg1: memref<1x4x256xf32, #tpu.memory_space<vmem>>, %arg2: memref<8x72xf32, #tpu.memory_space<vmem>>, %arg3: memref<4x8x72xf32, #tpu.memory_space<vmem>>, %arg4: memref<5x8x1xf32, #tpu.memory_space<vmem>>, %arg5: memref<5x8x1xf32, #tpu.memory_space<vmem>>, %arg6: memref<1x324xf32, #tpu.memory_space<vmem>>, %arg7: memref<1x100xf32, #tpu.memory_space<vmem>>, %arg8: memref<324x100xf32, #tpu.memory_space<vmem>>, %arg9: memref<1x8x64xf32, #tpu.memory_space<vmem>>, %arg10: memref<8x362xf32, #tpu.memory_space<vmem>>, %arg11: memref<8x122xf32, #tpu.memory_space<vmem>>, %arg12: memref<72x324xf32, #tpu.memory_space<vmem>>, %arg13: memref<72x100xf32, #tpu.memory_space<vmem>>) attributes {dimension_semantics = [#tpu.dimension_semantics<parallel>], iteration_bounds = array<i64: 2>, scalar_prefetch = 0 : i64, scratch_operands = 4 : i64, tpu.core_type = #tpu.core_type<tc>, window_params = [{transform_indices = @transform_0, window_bounds = array<i64: 1, 4, 256>}, {pipeline_mode = #tpu.pipeline_mode<synchronous>, transform_indices = @transform_1, window_bounds = array<i64: 8, 72>}, {pipeline_mode = #tpu.pipeline_mode<synchronous>, transform_indices = @transform_2, window_bounds = array<i64: 4, 8, 72>}, {pipeline_mode = #tpu.pipeline_mode<synchronous>, transform_indices = @transform_3, window_bounds = array<i64: 5, 8, 1>}, {pipeline_mode = #tpu.pipeline_mode<synchronous>, transform_indices = @transform_4, window_bounds = array<i64: 5, 8, 1>}, {pipeline_mode = #tpu.pipeline_mode<synchronous>, transform_indices = @transform_5, window_bounds = array<i64: 1, 324>}, {pipeline_mode = #tpu.pipeline_mode<synchronous>, transform_indices = @transform_6, window_bounds = array<i64: 1, 100>}, {pipeline_mode = #tpu.pipeline_mode<synchronous>, transform_indices = @transform_7, window_bounds = array<i64: 324, 100>}, {transform_indices = @transform_8, window_bounds = array<i64: 1, 8, 64>}]} {
    %cst = arith.constant 0.000000e+00 : f32
    %0 = vector.broadcast %cst : f32 to vector<8x362xf32>
    %c0 = arith.constant 0 : index
    %c0_0 = arith.constant 0 : index
    %1 = vector.load %arg10[%c0, %c0_0] : memref<8x362xf32, #tpu.memory_space<vmem>>, vector<8x362xf32>
    tpu.vector_store %arg10[%c0, %c0_0], %0 {strides = array<i32>} : memref<8x362xf32, #tpu.memory_space<vmem>>, vector<8x362xf32>,
    %cst_1 = arith.constant 0.000000e+00 : f32
    %2 = vector.broadcast %cst_1 : f32 to vector<8x122xf32>
    %c0_2 = arith.constant 0 : index
    %c0_3 = arith.constant 0 : index
    %3 = vector.load %arg11[%c0_2, %c0_3] : memref<8x122xf32, #tpu.memory_space<vmem>>, vector<8x122xf32>
    tpu.vector_store %arg11[%c0_2, %c0_3], %2 {strides = array<i32>} : memref<8x122xf32, #tpu.memory_space<vmem>>, vector<8x122xf32>,
    %cst_4 = arith.constant 0.000000e+00 : f32
    %4 = vector.broadcast %cst_4 : f32 to vector<72x324xf32>
    %c0_5 = arith.constant 0 : index
    %c0_6 = arith.constant 0 : index
    %5 = vector.load %arg12[%c0_5, %c0_6] : memref<72x324xf32, #tpu.memory_space<vmem>>, vector<72x324xf32>
    tpu.vector_store %arg12[%c0_5, %c0_6], %4 {strides = array<i32>} : memref<72x324xf32, #tpu.memory_space<vmem>>, vector<72x324xf32>,
    %cst_7 = arith.constant 0.000000e+00 : f32
    %6 = vector.broadcast %cst_7 : f32 to vector<72x100xf32>
    %c0_8 = arith.constant 0 : index
    %c0_9 = arith.constant 0 : index
    %7 = vector.load %arg13[%c0_8, %c0_9] : memref<72x100xf32, #tpu.memory_space<vmem>>, vector<72x100xf32>
    tpu.vector_store %arg13[%c0_8, %c0_9], %6 {strides = array<i32>} : memref<72x100xf32, #tpu.memory_space<vmem>>, vector<72x100xf32>,
    %c0_10 = arith.constant 0 : index
    %c0_11 = arith.constant 0 : index
    %8 = vector.load %arg6[%c0_10, %c0_11] : memref<1x324xf32, #tpu.memory_space<vmem>>, vector<1x324xf32>
    %cst_12 = arith.constant 0.000000e+00 : f32
    %9 = vector.broadcast %cst_12 : f32 to vector<1x324xf32>
    %10 = arith.cmpf ogt, %8, %9 : vector<1x324xf32>
    %c0_13 = arith.constant 0 : index
    %c0_14 = arith.constant 0 : index
    %11 = vector.load %arg7[%c0_13, %c0_14] : memref<1x100xf32, #tpu.memory_space<vmem>>, vector<1x100xf32>
    %cst_15 = arith.constant 0.000000e+00 : f32
    %12 = vector.broadcast %cst_15 : f32 to vector<1x100xf32>
    %13 = arith.cmpf ogt, %11, %12 : vector<1x100xf32>
    %c0_16 = arith.constant 0 : index
    %c0_17 = arith.constant 0 : index
    %c0_18 = arith.constant 0 : index
    %14 = vector.load %arg1[%c0_16, %c0_17, %c0_18] : memref<1x4x256xf32, #tpu.memory_space<vmem>>, vector<1x4x256xf32>
    %15 = vector.shape_cast %14 : vector<1x4x256xf32> to vector<4x256xf32>
    %16 = vector.extract_strided_slice %15 {offsets = [0, 0], sizes = [4, 16], strides = [1, 1]} : vector<4x256xf32> to vector<4x16xf32>
    %c0_19 = arith.constant 0 : index
    %c38 = arith.constant 38 : index
    %17 = vector.load %arg10[%c0_19, %c38] : memref<8x362xf32, #tpu.memory_space<vmem>>, vector<4x16xf32>
    tpu.vector_store %arg10[%c0_19, %c38], %16 {strides = array<i32>} : memref<8x362xf32, #tpu.memory_space<vmem>>, vector<4x16xf32>,
    %18 = vector.extract_strided_slice %15 {offsets = [0, 16], sizes = [4, 16], strides = [1, 1]} : vector<4x256xf32> to vector<4x16xf32>
    %c0_20 = arith.constant 0 : index
    %c56 = arith.constant 56 : index
    %19 = vector.load %arg10[%c0_20, %c56] : memref<8x362xf32, #tpu.memory_space<vmem>>, vector<4x16xf32>
    tpu.vector_store %arg10[%c0_20, %c56], %18 {strides = array<i32>} : memref<8x362xf32, #tpu.memory_space<vmem>>, vector<4x16xf32>,
    %20 = vector.extract_strided_slice %15 {offsets = [0, 32], sizes = [4, 16], strides = [1, 1]} : vector<4x256xf32> to vector<4x16xf32>
    %c0_21 = arith.constant 0 : index
    %c74 = arith.constant 74 : index
    %21 = vector.load %arg10[%c0_21, %c74] : memref<8x362xf32, #tpu.memory_space<vmem>>, vector<4x16xf32>
    tpu.vector_store %arg10[%c0_21, %c74], %20 {strides = array<i32>} : memref<8x362xf32, #tpu.memory_space<vmem>>, vector<4x16xf32>,
    %22 = vector.extract_strided_slice %15 {offsets = [0, 48], sizes = [4, 16], strides = [1, 1]} : vector<4x256xf32> to vector<4x16xf32>
    %c0_22 = arith.constant 0 : index
    %c92 = arith.constant 92 : index
    %23 = vector.load %arg10[%c0_22, %c92] : memref<8x362xf32, #tpu.memory_space<vmem>>, vector<4x16xf32>
    tpu.vector_store %arg10[%c0_22, %c92], %22 {strides = array<i32>} : memref<8x362xf32, #tpu.memory_space<vmem>>, vector<4x16xf32>,
    %24 = vector.extract_strided_slice %15 {offsets = [0, 64], sizes = [4, 16], strides = [1, 1]} : vector<4x256xf32> to vector<4x16xf32>
    %c0_23 = arith.constant 0 : index
    %c110 = arith.constant 110 : index
    %25 = vector.load %arg10[%c0_23, %c110] : memref<8x362xf32, #tpu.memory_space<vmem>>, vector<4x16xf32>
    tpu.vector_store %arg10[%c0_23, %c110], %24 {strides = array<i32>} : memref<8x362xf32, #tpu.memory_space<vmem>>, vector<4x16xf32>,
    %26 = vector.extract_strided_slice %15 {offsets = [0, 80], sizes = [4, 16], strides = [1, 1]} : vector<4x256xf32> to vector<4x16xf32>
    %c0_24 = arith.constant 0 : index
    %c128 = arith.constant 128 : index
    %27 = vector.load %arg10[%c0_24, %c128] : memref<8x362xf32, #tpu.memory_space<vmem>>, vector<4x16xf32>
    tpu.vector_store %arg10[%c0_24, %c128], %26 {strides = array<i32>} : memref<8x362xf32, #tpu.memory_space<vmem>>, vector<4x16xf32>,
    %28 = vector.extract_strided_slice %15 {offsets = [0, 96], sizes = [4, 16], strides = [1, 1]} : vector<4x256xf32> to vector<4x16xf32>
    %c0_25 = arith.constant 0 : index
    %c146 = arith.constant 146 : index
    %29 = vector.load %arg10[%c0_25, %c146] : memref<8x362xf32, #tpu.memory_space<vmem>>, vector<4x16xf32>
    tpu.vector_store %arg10[%c0_25, %c146], %28 {strides = array<i32>} : memref<8x362xf32, #tpu.memory_space<vmem>>, vector<4x16xf32>,
    %30 = vector.extract_strided_slice %15 {offsets = [0, 112], sizes = [4, 16], strides = [1, 1]} : vector<4x256xf32> to vector<4x16xf32>
    %c0_26 = arith.constant 0 : index
    %c164 = arith.constant 164 : index
    %31 = vector.load %arg10[%c0_26, %c164] : memref<8x362xf32, #tpu.memory_space<vmem>>, vector<4x16xf32>
    tpu.vector_store %arg10[%c0_26, %c164], %30 {strides = array<i32>} : memref<8x362xf32, #tpu.memory_space<vmem>>, vector<4x16xf32>,
    %32 = vector.extract_strided_slice %15 {offsets = [0, 128], sizes = [4, 16], strides = [1, 1]} : vector<4x256xf32> to vector<4x16xf32>
    %c0_27 = arith.constant 0 : index
    %c182 = arith.constant 182 : index
    %33 = vector.load %arg10[%c0_27, %c182] : memref<8x362xf32, #tpu.memory_space<vmem>>, vector<4x16xf32>
    tpu.vector_store %arg10[%c0_27, %c182], %32 {strides = array<i32>} : memref<8x362xf32, #tpu.memory_space<vmem>>, vector<4x16xf32>,
    %34 = vector.extract_strided_slice %15 {offsets = [0, 144], sizes = [4, 16], strides = [1, 1]} : vector<4x256xf32> to vector<4x16xf32>
    %c0_28 = arith.constant 0 : index
    %c200 = arith.constant 200 : index
    %35 = vector.load %arg10[%c0_28, %c200] : memref<8x362xf32, #tpu.memory_space<vmem>>, vector<4x16xf32>
    tpu.vector_store %arg10[%c0_28, %c200], %34 {strides = array<i32>} : memref<8x362xf32, #tpu.memory_space<vmem>>, vector<4x16xf32>,
    %36 = vector.extract_strided_slice %15 {offsets = [0, 160], sizes = [4, 16], strides = [1, 1]} : vector<4x256xf32> to vector<4x16xf32>
    %c0_29 = arith.constant 0 : index
    %c218 = arith.constant 218 : index
    %37 = vector.load %arg10[%c0_29, %c218] : memref<8x362xf32, #tpu.memory_space<vmem>>, vector<4x16xf32>
    tpu.vector_store %arg10[%c0_29, %c218], %36 {strides = array<i32>} : memref<8x362xf32, #tpu.memory_space<vmem>>, vector<4x16xf32>,
    %38 = vector.extract_strided_slice %15 {offsets = [0, 176], sizes = [4, 16], strides = [1, 1]} : vector<4x256xf32> to vector<4x16xf32>
    %c0_30 = arith.constant 0 : index
    %c236 = arith.constant 236 : index
    %39 = vector.load %arg10[%c0_30, %c236] : memref<8x362xf32, #tpu.memory_space<vmem>>, vector<4x16xf32>
    tpu.vector_store %arg10[%c0_30, %c236], %38 {strides = array<i32>} : memref<8x362xf32, #tpu.memory_space<vmem>>, vector<4x16xf32>,
    %40 = vector.extract_strided_slice %15 {offsets = [0, 192], sizes = [4, 16], strides = [1, 1]} : vector<4x256xf32> to vector<4x16xf32>
    %c0_31 = arith.constant 0 : index
    %c254 = arith.constant 254 : index
    %41 = vector.load %arg10[%c0_31, %c254] : memref<8x362xf32, #tpu.memory_space<vmem>>, vector<4x16xf32>
    tpu.vector_store %arg10[%c0_31, %c254], %40 {strides = array<i32>} : memref<8x362xf32, #tpu.memory_space<vmem>>, vector<4x16xf32>,
    %42 = vector.extract_strided_slice %15 {offsets = [0, 208], sizes = [4, 16], strides = [1, 1]} : vector<4x256xf32> to vector<4x16xf32>
    %c0_32 = arith.constant 0 : index
    %c272 = arith.constant 272 : index
    %43 = vector.load %arg10[%c0_32, %c272] : memref<8x362xf32, #tpu.memory_space<vmem>>, vector<4x16xf32>
    tpu.vector_store %arg10[%c0_32, %c272], %42 {strides = array<i32>} : memref<8x362xf32, #tpu.memory_space<vmem>>, vector<4x16xf32>,
    %44 = vector.extract_strided_slice %15 {offsets = [0, 224], sizes = [4, 16], strides = [1, 1]} : vector<4x256xf32> to vector<4x16xf32>
    %c0_33 = arith.constant 0 : index
    %c290 = arith.constant 290 : index
    %45 = vector.load %arg10[%c0_33, %c290] : memref<8x362xf32, #tpu.memory_space<vmem>>, vector<4x16xf32>
    tpu.vector_store %arg10[%c0_33, %c290], %44 {strides = array<i32>} : memref<8x362xf32, #tpu.memory_space<vmem>>, vector<4x16xf32>,
    %46 = vector.extract_strided_slice %15 {offsets = [0, 240], sizes = [4, 16], strides = [1, 1]} : vector<4x256xf32> to vector<4x16xf32>
    %c0_34 = arith.constant 0 : index
    %c308 = arith.constant 308 : index
    %47 = vector.load %arg10[%c0_34, %c308] : memref<8x362xf32, #tpu.memory_space<vmem>>, vector<4x16xf32>
    tpu.vector_store %arg10[%c0_34, %c308], %46 {strides = array<i32>} : memref<8x362xf32, #tpu.memory_space<vmem>>, vector<4x16xf32>,
    %c0_35 = arith.constant 0 : index
    %c0_36 = arith.constant 0 : index
    %48 = vector.load %arg10[%c0_35, %c0_36] : memref<8x362xf32, #tpu.memory_space<vmem>>, vector<4x324xf32>
    %c0_37 = arith.constant 0 : index
    %c0_38 = arith.constant 0 : index
    %49 = vector.load %arg12[%c0_37, %c0_38] : memref<72x324xf32, #tpu.memory_space<vmem>>, vector<4x324xf32>
    tpu.vector_store %arg12[%c0_37, %c0_38], %48 {strides = array<i32>} : memref<72x324xf32, #tpu.memory_space<vmem>>, vector<4x324xf32>,
    %c0_39 = arith.constant 0 : index
    %c1 = arith.constant 1 : index
    %50 = vector.load %arg10[%c0_39, %c1] : memref<8x362xf32, #tpu.memory_space<vmem>>, vector<4x324xf32>
    %c8 = arith.constant 8 : index
    %c0_40 = arith.constant 0 : index
    %51 = vector.load %arg12[%c8, %c0_40] : memref<72x324xf32, #tpu.memory_space<vmem>>, vector<4x324xf32>
    tpu.vector_store %arg12[%c8, %c0_40], %50 {strides = array<i32>} : memref<72x324xf32, #tpu.memory_space<vmem>>, vector<4x324xf32>,
    %c0_41 = arith.constant 0 : index
    %c2 = arith.constant 2 : index
    %52 = vector.load %arg10[%c0_41, %c2] : memref<8x362xf32, #tpu.memory_space<vmem>>, vector<4x324xf32>
    %c16 = arith.constant 16 : index
    %c0_42 = arith.constant 0 : index
    %53 = vector.load %arg12[%c16, %c0_42] : memref<72x324xf32, #tpu.memory_space<vmem>>, vector<4x324xf32>
    tpu.vector_store %arg12[%c16, %c0_42], %52 {strides = array<i32>} : memref<72x324xf32, #tpu.memory_space<vmem>>, vector<4x324xf32>,
    %c0_43 = arith.constant 0 : index
    %c18 = arith.constant 18 : index
    %54 = vector.load %arg10[%c0_43, %c18] : memref<8x362xf32, #tpu.memory_space<vmem>>, vector<4x324xf32>
    %c24 = arith.constant 24 : index
    %c0_44 = arith.constant 0 : index
    %55 = vector.load %arg12[%c24, %c0_44] : memref<72x324xf32, #tpu.memory_space<vmem>>, vector<4x324xf32>
    tpu.vector_store %arg12[%c24, %c0_44], %54 {strides = array<i32>} : memref<72x324xf32, #tpu.memory_space<vmem>>, vector<4x324xf32>,
    %c0_45 = arith.constant 0 : index
    %c19 = arith.constant 19 : index
    %56 = vector.load %arg10[%c0_45, %c19] : memref<8x362xf32, #tpu.memory_space<vmem>>, vector<4x324xf32>
    %c32 = arith.constant 32 : index
    %c0_46 = arith.constant 0 : index
    %57 = vector.load %arg12[%c32, %c0_46] : memref<72x324xf32, #tpu.memory_space<vmem>>, vector<4x324xf32>
    tpu.vector_store %arg12[%c32, %c0_46], %56 {strides = array<i32>} : memref<72x324xf32, #tpu.memory_space<vmem>>, vector<4x324xf32>,
    %c0_47 = arith.constant 0 : index
    %c20 = arith.constant 20 : index
    %58 = vector.load %arg10[%c0_47, %c20] : memref<8x362xf32, #tpu.memory_space<vmem>>, vector<4x324xf32>
    %c40 = arith.constant 40 : index
    %c0_48 = arith.constant 0 : index
    %59 = vector.load %arg12[%c40, %c0_48] : memref<72x324xf32, #tpu.memory_space<vmem>>, vector<4x324xf32>
    tpu.vector_store %arg12[%c40, %c0_48], %58 {strides = array<i32>} : memref<72x324xf32, #tpu.memory_space<vmem>>, vector<4x324xf32>,
    %c0_49 = arith.constant 0 : index
    %c36 = arith.constant 36 : index
    %60 = vector.load %arg10[%c0_49, %c36] : memref<8x362xf32, #tpu.memory_space<vmem>>, vector<4x324xf32>
    %c48 = arith.constant 48 : index
    %c0_50 = arith.constant 0 : index
    %61 = vector.load %arg12[%c48, %c0_50] : memref<72x324xf32, #tpu.memory_space<vmem>>, vector<4x324xf32>
    tpu.vector_store %arg12[%c48, %c0_50], %60 {strides = array<i32>} : memref<72x324xf32, #tpu.memory_space<vmem>>, vector<4x324xf32>,
    %c0_51 = arith.constant 0 : index
    %c37 = arith.constant 37 : index
    %62 = vector.load %arg10[%c0_51, %c37] : memref<8x362xf32, #tpu.memory_space<vmem>>, vector<4x324xf32>
    %c56_52 = arith.constant 56 : index
    %c0_53 = arith.constant 0 : index
    %63 = vector.load %arg12[%c56_52, %c0_53] : memref<72x324xf32, #tpu.memory_space<vmem>>, vector<4x324xf32>
    tpu.vector_store %arg12[%c56_52, %c0_53], %62 {strides = array<i32>} : memref<72x324xf32, #tpu.memory_space<vmem>>, vector<4x324xf32>,
    %c0_54 = arith.constant 0 : index
    %c38_55 = arith.constant 38 : index
    %64 = vector.load %arg10[%c0_54, %c38_55] : memref<8x362xf32, #tpu.memory_space<vmem>>, vector<4x324xf32>
    %c64 = arith.constant 64 : index
    %c0_56 = arith.constant 0 : index
    %65 = vector.load %arg12[%c64, %c0_56] : memref<72x324xf32, #tpu.memory_space<vmem>>, vector<4x324xf32>
    tpu.vector_store %arg12[%c64, %c0_56], %64 {strides = array<i32>} : memref<72x324xf32, #tpu.memory_space<vmem>>, vector<4x324xf32>,
    %c0_57 = arith.constant 0 : index
    %c0_58 = arith.constant 0 : index
    %66 = vector.load %arg2[%c0_57, %c0_58] : memref<8x72xf32, #tpu.memory_space<vmem>>, vector<8x72xf32>
    %c0_59 = arith.constant 0 : index
    %c0_60 = arith.constant 0 : index
    %67 = vector.load %arg12[%c0_59, %c0_60] : memref<72x324xf32, #tpu.memory_space<vmem>>, vector<72x324xf32>
    %cst_61 = arith.constant dense<0.000000e+00> : vector<8x324xf32>
    %68 = tpu.matmul %66, %67, %cst_61 {dimension_numbers = #tpu.dot_dimension_numbers<[1], [0], [0], [1], [0, 0, 1, 1], [], []>} : vector<8x72xf32>, vector<72x324xf32>, vector<8x324xf32> -> vector<8x324xf32>
    %c0_62 = arith.constant 0 : index
    %c0_63 = arith.constant 0 : index
    %c0_64 = arith.constant 0 : index
    %69 = vector.load %arg4[%c0_62, %c0_63, %c0_64] : memref<5x8x1xf32, #tpu.memory_space<vmem>>, vector<1x8x1xf32>
    %70 = vector.shape_cast %69 : vector<1x8x1xf32> to vector<8x1xf32>
    %71 = vector.broadcast %70 : vector<8x1xf32> to vector<8x324xf32>
    %72 = arith.mulf %68, %71 : vector<8x324xf32>
    %c0_65 = arith.constant 0 : index
    %c0_66 = arith.constant 0 : index
    %c0_67 = arith.constant 0 : index
    %73 = vector.load %arg5[%c0_65, %c0_66, %c0_67] : memref<5x8x1xf32, #tpu.memory_space<vmem>>, vector<1x8x1xf32>
    %74 = vector.shape_cast %73 : vector<1x8x1xf32> to vector<8x1xf32>
    %75 = vector.broadcast %74 : vector<8x1xf32> to vector<8x324xf32>
    %76 = arith.addf %72, %75 : vector<8x324xf32>
    %cst_68 = arith.constant -1.000000e+30 : f32
    %77 = vector.shape_cast %10 : vector<1x324xi1> to vector<1x324xi1>
    %78 = vector.broadcast %77 : vector<1x324xi1> to vector<8x324xi1>
    %79 = vector.broadcast %cst_68 : f32 to vector<8x324xf32>
    %80 = arith.select %78, %76, %79 : vector<8x324xi1>, vector<8x324xf32>
    %c0_69 = arith.constant 0 : index
    %c19_70 = arith.constant 19 : index
    %81 = vector.load %arg10[%c0_69, %c19_70] : memref<8x362xf32, #tpu.memory_space<vmem>>, vector<8x324xf32>
    tpu.vector_store %arg10[%c0_69, %c19_70], %80 {strides = array<i32>} : memref<8x362xf32, #tpu.memory_space<vmem>>, vector<8x324xf32>,
    %c0_71 = arith.constant 0 : index
    %c0_72 = arith.constant 0 : index
    %82 = vector.load %arg10[%c0_71, %c0_72] : memref<8x362xf32, #tpu.memory_space<vmem>>, vector<8x324xf32>
    %c0_73 = arith.constant 0 : index
    %c1_74 = arith.constant 1 : index
    %83 = vector.load %arg10[%c0_73, %c1_74] : memref<8x362xf32, #tpu.memory_space<vmem>>, vector<8x324xf32>
    %84 = arith.maximumf %82, %83 : vector<8x324xf32>
    %c0_75 = arith.constant 0 : index
    %c2_76 = arith.constant 2 : index
    %85 = vector.load %arg10[%c0_75, %c2_76] : memref<8x362xf32, #tpu.memory_space<vmem>>, vector<8x324xf32>
    %86 = arith.maximumf %84, %85 : vector<8x324xf32>
    %c0_77 = arith.constant 0 : index
    %c18_78 = arith.constant 18 : index
    %87 = vector.load %arg10[%c0_77, %c18_78] : memref<8x362xf32, #tpu.memory_space<vmem>>, vector<8x324xf32>
    %88 = arith.maximumf %86, %87 : vector<8x324xf32>
    %c0_79 = arith.constant 0 : index
    %c19_80 = arith.constant 19 : index
    %89 = vector.load %arg10[%c0_79, %c19_80] : memref<8x362xf32, #tpu.memory_space<vmem>>, vector<8x324xf32>
    %90 = arith.maximumf %88, %89 : vector<8x324xf32>
    %c0_81 = arith.constant 0 : index
    %c20_82 = arith.constant 20 : index
    %91 = vector.load %arg10[%c0_81, %c20_82] : memref<8x362xf32, #tpu.memory_space<vmem>>, vector<8x324xf32>
    %92 = arith.maximumf %90, %91 : vector<8x324xf32>
    %c0_83 = arith.constant 0 : index
    %c36_84 = arith.constant 36 : index
    %93 = vector.load %arg10[%c0_83, %c36_84] : memref<8x362xf32, #tpu.memory_space<vmem>>, vector<8x324xf32>
    %94 = arith.maximumf %92, %93 : vector<8x324xf32>
    %c0_85 = arith.constant 0 : index
    %c37_86 = arith.constant 37 : index
    %95 = vector.load %arg10[%c0_85, %c37_86] : memref<8x362xf32, #tpu.memory_space<vmem>>, vector<8x324xf32>
    %96 = arith.maximumf %94, %95 : vector<8x324xf32>
    %c0_87 = arith.constant 0 : index
    %c38_88 = arith.constant 38 : index
    %97 = vector.load %arg10[%c0_87, %c38_88] : memref<8x362xf32, #tpu.memory_space<vmem>>, vector<8x324xf32>
    %98 = arith.maximumf %96, %97 : vector<8x324xf32>
    %c0_89 = arith.constant 0 : index
    %c0_90 = arith.constant 0 : index
    %99 = vector.load %arg8[%c0_89, %c0_90] : memref<324x100xf32, #tpu.memory_space<vmem>>, vector<324x100xf32>
    %cst_91 = arith.constant dense<0.000000e+00> : vector<8x100xf32>
    %100 = tpu.matmul %98, %99, %cst_91 {dimension_numbers = #tpu.dot_dimension_numbers<[1], [0], [0], [1], [0, 0, 1, 1], [], []>} : vector<8x324xf32>, vector<324x100xf32>, vector<8x100xf32> -> vector<8x100xf32>
    %c0_92 = arith.constant 0 : index
    %c0_93 = arith.constant 0 : index
    %c0_94 = arith.constant 0 : index
    %101 = vector.load %arg3[%c0_92, %c0_93, %c0_94] : memref<4x8x72xf32, #tpu.memory_space<vmem>>, vector<1x8x72xf32>
    %102 = vector.shape_cast %101 : vector<1x8x72xf32> to vector<8x72xf32>
    %c1_95 = arith.constant 1 : index
    %c0_96 = arith.constant 0 : index
    %c0_97 = arith.constant 0 : index
    %103 = vector.load %arg4[%c1_95, %c0_96, %c0_97] : memref<5x8x1xf32, #tpu.memory_space<vmem>>, vector<1x8x1xf32>
    %104 = vector.shape_cast %103 : vector<1x8x1xf32> to vector<8x1xf32>
    %c1_98 = arith.constant 1 : index
    %c0_99 = arith.constant 0 : index
    %c0_100 = arith.constant 0 : index
    %105 = vector.load %arg5[%c1_98, %c0_99, %c0_100] : memref<5x8x1xf32, #tpu.memory_space<vmem>>, vector<1x8x1xf32>
    %106 = vector.shape_cast %105 : vector<1x8x1xf32> to vector<8x1xf32>
    %cst_101 = arith.constant 0.000000e+00 : f32
    %107 = vector.broadcast %cst_101 : f32 to vector<8x100xf32>
    %108 = arith.maximumf %100, %107 : vector<8x100xf32>
    %c0_102 = arith.constant 0 : index
    %c11 = arith.constant 11 : index
    %109 = vector.load %arg11[%c0_102, %c11] : memref<8x122xf32, #tpu.memory_space<vmem>>, vector<8x100xf32>
    tpu.vector_store %arg11[%c0_102, %c11], %108 {strides = array<i32>} : memref<8x122xf32, #tpu.memory_space<vmem>>, vector<8x100xf32>,
    %c0_103 = arith.constant 0 : index
    %c0_104 = arith.constant 0 : index
    %110 = vector.load %arg11[%c0_103, %c0_104] : memref<8x122xf32, #tpu.memory_space<vmem>>, vector<8x100xf32>
    %c0_105 = arith.constant 0 : index
    %c0_106 = arith.constant 0 : index
    %111 = vector.load %arg13[%c0_105, %c0_106] : memref<72x100xf32, #tpu.memory_space<vmem>>, vector<8x100xf32>
    tpu.vector_store %arg13[%c0_105, %c0_106], %110 {strides = array<i32>} : memref<72x100xf32, #tpu.memory_space<vmem>>, vector<8x100xf32>,
    %c0_107 = arith.constant 0 : index
    %c1_108 = arith.constant 1 : index
    %112 = vector.load %arg11[%c0_107, %c1_108] : memref<8x122xf32, #tpu.memory_space<vmem>>, vector<8x100xf32>
    %c8_109 = arith.constant 8 : index
    %c0_110 = arith.constant 0 : index
    %113 = vector.load %arg13[%c8_109, %c0_110] : memref<72x100xf32, #tpu.memory_space<vmem>>, vector<8x100xf32>
    tpu.vector_store %arg13[%c8_109, %c0_110], %112 {strides = array<i32>} : memref<72x100xf32, #tpu.memory_space<vmem>>, vector<8x100xf32>,
    %c0_111 = arith.constant 0 : index
    %c2_112 = arith.constant 2 : index
    %114 = vector.load %arg11[%c0_111, %c2_112] : memref<8x122xf32, #tpu.memory_space<vmem>>, vector<8x100xf32>
    %c16_113 = arith.constant 16 : index
    %c0_114 = arith.constant 0 : index
    %115 = vector.load %arg13[%c16_113, %c0_114] : memref<72x100xf32, #tpu.memory_space<vmem>>, vector<8x100xf32>
    tpu.vector_store %arg13[%c16_113, %c0_114], %114 {strides = array<i32>} : memref<72x100xf32, #tpu.memory_space<vmem>>, vector<8x100xf32>,
    %c0_115 = arith.constant 0 : index
    %c10 = arith.constant 10 : index
    %116 = vector.load %arg11[%c0_115, %c10] : memref<8x122xf32, #tpu.memory_space<vmem>>, vector<8x100xf32>
    %c24_116 = arith.constant 24 : index
    %c0_117 = arith.constant 0 : index
    %117 = vector.load %arg13[%c24_116, %c0_117] : memref<72x100xf32, #tpu.memory_space<vmem>>, vector<8x100xf32>
    tpu.vector_store %arg13[%c24_116, %c0_117], %116 {strides = array<i32>} : memref<72x100xf32, #tpu.memory_space<vmem>>, vector<8x100xf32>,
    %c0_118 = arith.constant 0 : index
    %c11_119 = arith.constant 11 : index
    %118 = vector.load %arg11[%c0_118, %c11_119] : memref<8x122xf32, #tpu.memory_space<vmem>>, vector<8x100xf32>
    %c32_120 = arith.constant 32 : index
    %c0_121 = arith.constant 0 : index
    %119 = vector.load %arg13[%c32_120, %c0_121] : memref<72x100xf32, #tpu.memory_space<vmem>>, vector<8x100xf32>
    tpu.vector_store %arg13[%c32_120, %c0_121], %118 {strides = array<i32>} : memref<72x100xf32, #tpu.memory_space<vmem>>, vector<8x100xf32>,
    %c0_122 = arith.constant 0 : index
    %c12 = arith.constant 12 : index
    %120 = vector.load %arg11[%c0_122, %c12] : memref<8x122xf32, #tpu.memory_space<vmem>>, vector<8x100xf32>
    %c40_123 = arith.constant 40 : index
    %c0_124 = arith.constant 0 : index
    %121 = vector.load %arg13[%c40_123, %c0_124] : memref<72x100xf32, #tpu.memory_space<vmem>>, vector<8x100xf32>
    tpu.vector_store %arg13[%c40_123, %c0_124], %120 {strides = array<i32>} : memref<72x100xf32, #tpu.memory_space<vmem>>, vector<8x100xf32>,
    %c0_125 = arith.constant 0 : index
    %c20_126 = arith.constant 20 : index
    %122 = vector.load %arg11[%c0_125, %c20_126] : memref<8x122xf32, #tpu.memory_space<vmem>>, vector<8x100xf32>
    %c48_127 = arith.constant 48 : index
    %c0_128 = arith.constant 0 : index
    %123 = vector.load %arg13[%c48_127, %c0_128] : memref<72x100xf32, #tpu.memory_space<vmem>>, vector<8x100xf32>
    tpu.vector_store %arg13[%c48_127, %c0_128], %122 {strides = array<i32>} : memref<72x100xf32, #tpu.memory_space<vmem>>, vector<8x100xf32>,
    %c0_129 = arith.constant 0 : index
    %c21 = arith.constant 21 : index
    %124 = vector.load %arg11[%c0_129, %c21] : memref<8x122xf32, #tpu.memory_space<vmem>>, vector<8x100xf32>
    %c56_130 = arith.constant 56 : index
    %c0_131 = arith.constant 0 : index
    %125 = vector.load %arg13[%c56_130, %c0_131] : memref<72x100xf32, #tpu.memory_space<vmem>>, vector<8x100xf32>
    tpu.vector_store %arg13[%c56_130, %c0_131], %124 {strides = array<i32>} : memref<72x100xf32, #tpu.memory_space<vmem>>, vector<8x100xf32>,
    %c0_132 = arith.constant 0 : index
    %c22 = arith.constant 22 : index
    %126 = vector.load %arg11[%c0_132, %c22] : memref<8x122xf32, #tpu.memory_space<vmem>>, vector<8x100xf32>
    %c64_133 = arith.constant 64 : index
    %c0_134 = arith.constant 0 : index
    %127 = vector.load %arg13[%c64_133, %c0_134] : memref<72x100xf32, #tpu.memory_space<vmem>>, vector<8x100xf32>
    tpu.vector_store %arg13[%c64_133, %c0_134], %126 {strides = array<i32>} : memref<72x100xf32, #tpu.memory_space<vmem>>, vector<8x100xf32>,
    %c0_135 = arith.constant 0 : index
    %c0_136 = arith.constant 0 : index
    %128 = vector.load %arg13[%c0_135, %c0_136] : memref<72x100xf32, #tpu.memory_space<vmem>>, vector<72x100xf32>
    %cst_137 = arith.constant dense<0.000000e+00> : vector<8x100xf32>
    %129 = tpu.matmul %102, %128, %cst_137 {dimension_numbers = #tpu.dot_dimension_numbers<[1], [0], [0], [1], [0, 0, 1, 1], [], []>} : vector<8x72xf32>, vector<72x100xf32>, vector<8x100xf32> -> vector<8x100xf32>
    %130 = vector.broadcast %104 : vector<8x1xf32> to vector<8x100xf32>
    %131 = arith.mulf %129, %130 : vector<8x100xf32>
    %132 = vector.broadcast %106 : vector<8x1xf32> to vector<8x100xf32>
    %133 = arith.addf %131, %132 : vector<8x100xf32>
    %cst_138 = arith.constant 0.000000e+00 : f32
    %134 = vector.shape_cast %13 : vector<1x100xi1> to vector<1x100xi1>
    %135 = vector.broadcast %134 : vector<1x100xi1> to vector<8x100xi1>
    %136 = vector.broadcast %cst_138 : f32 to vector<8x100xf32>
    %137 = arith.select %135, %133, %136 : vector<8x100xi1>, vector<8x100xf32>
    %c1_139 = arith.constant 1 : index
    %c0_140 = arith.constant 0 : index
    %c0_141 = arith.constant 0 : index
    %138 = vector.load %arg3[%c1_139, %c0_140, %c0_141] : memref<4x8x72xf32, #tpu.memory_space<vmem>>, vector<1x8x72xf32>
    %139 = vector.shape_cast %138 : vector<1x8x72xf32> to vector<8x72xf32>
    %c2_142 = arith.constant 2 : index
    %c0_143 = arith.constant 0 : index
    %c0_144 = arith.constant 0 : index
    %140 = vector.load %arg4[%c2_142, %c0_143, %c0_144] : memref<5x8x1xf32, #tpu.memory_space<vmem>>, vector<1x8x1xf32>
    %141 = vector.shape_cast %140 : vector<1x8x1xf32> to vector<8x1xf32>
    %c2_145 = arith.constant 2 : index
    %c0_146 = arith.constant 0 : index
    %c0_147 = arith.constant 0 : index
    %142 = vector.load %arg5[%c2_145, %c0_146, %c0_147] : memref<5x8x1xf32, #tpu.memory_space<vmem>>, vector<1x8x1xf32>
    %143 = vector.shape_cast %142 : vector<1x8x1xf32> to vector<8x1xf32>
    %cst_148 = arith.constant 0.000000e+00 : f32
    %144 = vector.broadcast %cst_148 : f32 to vector<8x100xf32>
    %145 = arith.maximumf %137, %144 : vector<8x100xf32>
    %c0_149 = arith.constant 0 : index
    %c11_150 = arith.constant 11 : index
    %146 = vector.load %arg11[%c0_149, %c11_150] : memref<8x122xf32, #tpu.memory_space<vmem>>, vector<8x100xf32>
    tpu.vector_store %arg11[%c0_149, %c11_150], %145 {strides = array<i32>} : memref<8x122xf32, #tpu.memory_space<vmem>>, vector<8x100xf32>,
    %c0_151 = arith.constant 0 : index
    %c0_152 = arith.constant 0 : index
    %147 = vector.load %arg11[%c0_151, %c0_152] : memref<8x122xf32, #tpu.memory_space<vmem>>, vector<8x100xf32>
    %c0_153 = arith.constant 0 : index
    %c0_154 = arith.constant 0 : index
    %148 = vector.load %arg13[%c0_153, %c0_154] : memref<72x100xf32, #tpu.memory_space<vmem>>, vector<8x100xf32>
    tpu.vector_store %arg13[%c0_153, %c0_154], %147 {strides = array<i32>} : memref<72x100xf32, #tpu.memory_space<vmem>>, vector<8x100xf32>,
    %c0_155 = arith.constant 0 : index
    %c1_156 = arith.constant 1 : index
    %149 = vector.load %arg11[%c0_155, %c1_156] : memref<8x122xf32, #tpu.memory_space<vmem>>, vector<8x100xf32>
    %c8_157 = arith.constant 8 : index
    %c0_158 = arith.constant 0 : index
    %150 = vector.load %arg13[%c8_157, %c0_158] : memref<72x100xf32, #tpu.memory_space<vmem>>, vector<8x100xf32>
    tpu.vector_store %arg13[%c8_157, %c0_158], %149 {strides = array<i32>} : memref<72x100xf32, #tpu.memory_space<vmem>>, vector<8x100xf32>,
    %c0_159 = arith.constant 0 : index
    %c2_160 = arith.constant 2 : index
    %151 = vector.load %arg11[%c0_159, %c2_160] : memref<8x122xf32, #tpu.memory_space<vmem>>, vector<8x100xf32>
    %c16_161 = arith.constant 16 : index
    %c0_162 = arith.constant 0 : index
    %152 = vector.load %arg13[%c16_161, %c0_162] : memref<72x100xf32, #tpu.memory_space<vmem>>, vector<8x100xf32>
    tpu.vector_store %arg13[%c16_161, %c0_162], %151 {strides = array<i32>} : memref<72x100xf32, #tpu.memory_space<vmem>>, vector<8x100xf32>,
    %c0_163 = arith.constant 0 : index
    %c10_164 = arith.constant 10 : index
    %153 = vector.load %arg11[%c0_163, %c10_164] : memref<8x122xf32, #tpu.memory_space<vmem>>, vector<8x100xf32>
    %c24_165 = arith.constant 24 : index
    %c0_166 = arith.constant 0 : index
    %154 = vector.load %arg13[%c24_165, %c0_166] : memref<72x100xf32, #tpu.memory_space<vmem>>, vector<8x100xf32>
    tpu.vector_store %arg13[%c24_165, %c0_166], %153 {strides = array<i32>} : memref<72x100xf32, #tpu.memory_space<vmem>>, vector<8x100xf32>,
    %c0_167 = arith.constant 0 : index
    %c11_168 = arith.constant 11 : index
    %155 = vector.load %arg11[%c0_167, %c11_168] : memref<8x122xf32, #tpu.memory_space<vmem>>, vector<8x100xf32>
    %c32_169 = arith.constant 32 : index
    %c0_170 = arith.constant 0 : index
    %156 = vector.load %arg13[%c32_169, %c0_170] : memref<72x100xf32, #tpu.memory_space<vmem>>, vector<8x100xf32>
    tpu.vector_store %arg13[%c32_169, %c0_170], %155 {strides = array<i32>} : memref<72x100xf32, #tpu.memory_space<vmem>>, vector<8x100xf32>,
    %c0_171 = arith.constant 0 : index
    %c12_172 = arith.constant 12 : index
    %157 = vector.load %arg11[%c0_171, %c12_172] : memref<8x122xf32, #tpu.memory_space<vmem>>, vector<8x100xf32>
    %c40_173 = arith.constant 40 : index
    %c0_174 = arith.constant 0 : index
    %158 = vector.load %arg13[%c40_173, %c0_174] : memref<72x100xf32, #tpu.memory_space<vmem>>, vector<8x100xf32>
    tpu.vector_store %arg13[%c40_173, %c0_174], %157 {strides = array<i32>} : memref<72x100xf32, #tpu.memory_space<vmem>>, vector<8x100xf32>,
    %c0_175 = arith.constant 0 : index
    %c20_176 = arith.constant 20 : index
    %159 = vector.load %arg11[%c0_175, %c20_176] : memref<8x122xf32, #tpu.memory_space<vmem>>, vector<8x100xf32>
    %c48_177 = arith.constant 48 : index
    %c0_178 = arith.constant 0 : index
    %160 = vector.load %arg13[%c48_177, %c0_178] : memref<72x100xf32, #tpu.memory_space<vmem>>, vector<8x100xf32>
    tpu.vector_store %arg13[%c48_177, %c0_178], %159 {strides = array<i32>} : memref<72x100xf32, #tpu.memory_space<vmem>>, vector<8x100xf32>,
    %c0_179 = arith.constant 0 : index
    %c21_180 = arith.constant 21 : index
    %161 = vector.load %arg11[%c0_179, %c21_180] : memref<8x122xf32, #tpu.memory_space<vmem>>, vector<8x100xf32>
    %c56_181 = arith.constant 56 : index
    %c0_182 = arith.constant 0 : index
    %162 = vector.load %arg13[%c56_181, %c0_182] : memref<72x100xf32, #tpu.memory_space<vmem>>, vector<8x100xf32>
    tpu.vector_store %arg13[%c56_181, %c0_182], %161 {strides = array<i32>} : memref<72x100xf32, #tpu.memory_space<vmem>>, vector<8x100xf32>,
    %c0_183 = arith.constant 0 : index
    %c22_184 = arith.constant 22 : index
    %163 = vector.load %arg11[%c0_183, %c22_184] : memref<8x122xf32, #tpu.memory_space<vmem>>, vector<8x100xf32>
    %c64_185 = arith.constant 64 : index
    %c0_186 = arith.constant 0 : index
    %164 = vector.load %arg13[%c64_185, %c0_186] : memref<72x100xf32, #tpu.memory_space<vmem>>, vector<8x100xf32>
    tpu.vector_store %arg13[%c64_185, %c0_186], %163 {strides = array<i32>} : memref<72x100xf32, #tpu.memory_space<vmem>>, vector<8x100xf32>,
    %c0_187 = arith.constant 0 : index
    %c0_188 = arith.constant 0 : index
    %165 = vector.load %arg13[%c0_187, %c0_188] : memref<72x100xf32, #tpu.memory_space<vmem>>, vector<72x100xf32>
    %cst_189 = arith.constant dense<0.000000e+00> : vector<8x100xf32>
    %166 = tpu.matmul %139, %165, %cst_189 {dimension_numbers = #tpu.dot_dimension_numbers<[1], [0], [0], [1], [0, 0, 1, 1], [], []>} : vector<8x72xf32>, vector<72x100xf32>, vector<8x100xf32> -> vector<8x100xf32>
    %167 = vector.broadcast %141 : vector<8x1xf32> to vector<8x100xf32>
    %168 = arith.mulf %166, %167 : vector<8x100xf32>
    %169 = vector.broadcast %143 : vector<8x1xf32> to vector<8x100xf32>
    %170 = arith.addf %168, %169 : vector<8x100xf32>
    %cst_190 = arith.constant 0.000000e+00 : f32
    %171 = vector.shape_cast %13 : vector<1x100xi1> to vector<1x100xi1>
    %172 = vector.broadcast %171 : vector<1x100xi1> to vector<8x100xi1>
    %173 = vector.broadcast %cst_190 : f32 to vector<8x100xf32>
    %174 = arith.select %172, %170, %173 : vector<8x100xi1>, vector<8x100xf32>
    %175 = arith.addf %174, %100 : vector<8x100xf32>
    %c2_191 = arith.constant 2 : index
    %c0_192 = arith.constant 0 : index
    %c0_193 = arith.constant 0 : index
    %176 = vector.load %arg3[%c2_191, %c0_192, %c0_193] : memref<4x8x72xf32, #tpu.memory_space<vmem>>, vector<1x8x72xf32>
    %177 = vector.shape_cast %176 : vector<1x8x72xf32> to vector<8x72xf32>
    %c3 = arith.constant 3 : index
    %c0_194 = arith.constant 0 : index
    %c0_195 = arith.constant 0 : index
    %178 = vector.load %arg4[%c3, %c0_194, %c0_195] : memref<5x8x1xf32, #tpu.memory_space<vmem>>, vector<1x8x1xf32>
    %179 = vector.shape_cast %178 : vector<1x8x1xf32> to vector<8x1xf32>
    %c3_196 = arith.constant 3 : index
    %c0_197 = arith.constant 0 : index
    %c0_198 = arith.constant 0 : index
    %180 = vector.load %arg5[%c3_196, %c0_197, %c0_198] : memref<5x8x1xf32, #tpu.memory_space<vmem>>, vector<1x8x1xf32>
    %181 = vector.shape_cast %180 : vector<1x8x1xf32> to vector<8x1xf32>
    %cst_199 = arith.constant 0.000000e+00 : f32
    %182 = vector.broadcast %cst_199 : f32 to vector<8x100xf32>
    %183 = arith.maximumf %175, %182 : vector<8x100xf32>
    %c0_200 = arith.constant 0 : index
    %c11_201 = arith.constant 11 : index
    %184 = vector.load %arg11[%c0_200, %c11_201] : memref<8x122xf32, #tpu.memory_space<vmem>>, vector<8x100xf32>
    tpu.vector_store %arg11[%c0_200, %c11_201], %183 {strides = array<i32>} : memref<8x122xf32, #tpu.memory_space<vmem>>, vector<8x100xf32>,
    %c0_202 = arith.constant 0 : index
    %c0_203 = arith.constant 0 : index
    %185 = vector.load %arg11[%c0_202, %c0_203] : memref<8x122xf32, #tpu.memory_space<vmem>>, vector<8x100xf32>
    %c0_204 = arith.constant 0 : index
    %c0_205 = arith.constant 0 : index
    %186 = vector.load %arg13[%c0_204, %c0_205] : memref<72x100xf32, #tpu.memory_space<vmem>>, vector<8x100xf32>
    tpu.vector_store %arg13[%c0_204, %c0_205], %185 {strides = array<i32>} : memref<72x100xf32, #tpu.memory_space<vmem>>, vector<8x100xf32>,
    %c0_206 = arith.constant 0 : index
    %c1_207 = arith.constant 1 : index
    %187 = vector.load %arg11[%c0_206, %c1_207] : memref<8x122xf32, #tpu.memory_space<vmem>>, vector<8x100xf32>
    %c8_208 = arith.constant 8 : index
    %c0_209 = arith.constant 0 : index
    %188 = vector.load %arg13[%c8_208, %c0_209] : memref<72x100xf32, #tpu.memory_space<vmem>>, vector<8x100xf32>
    tpu.vector_store %arg13[%c8_208, %c0_209], %187 {strides = array<i32>} : memref<72x100xf32, #tpu.memory_space<vmem>>, vector<8x100xf32>,
    %c0_210 = arith.constant 0 : index
    %c2_211 = arith.constant 2 : index
    %189 = vector.load %arg11[%c0_210, %c2_211] : memref<8x122xf32, #tpu.memory_space<vmem>>, vector<8x100xf32>
    %c16_212 = arith.constant 16 : index
    %c0_213 = arith.constant 0 : index
    %190 = vector.load %arg13[%c16_212, %c0_213] : memref<72x100xf32, #tpu.memory_space<vmem>>, vector<8x100xf32>
    tpu.vector_store %arg13[%c16_212, %c0_213], %189 {strides = array<i32>} : memref<72x100xf32, #tpu.memory_space<vmem>>, vector<8x100xf32>,
    %c0_214 = arith.constant 0 : index
    %c10_215 = arith.constant 10 : index
    %191 = vector.load %arg11[%c0_214, %c10_215] : memref<8x122xf32, #tpu.memory_space<vmem>>, vector<8x100xf32>
    %c24_216 = arith.constant 24 : index
    %c0_217 = arith.constant 0 : index
    %192 = vector.load %arg13[%c24_216, %c0_217] : memref<72x100xf32, #tpu.memory_space<vmem>>, vector<8x100xf32>
    tpu.vector_store %arg13[%c24_216, %c0_217], %191 {strides = array<i32>} : memref<72x100xf32, #tpu.memory_space<vmem>>, vector<8x100xf32>,
    %c0_218 = arith.constant 0 : index
    %c11_219 = arith.constant 11 : index
    %193 = vector.load %arg11[%c0_218, %c11_219] : memref<8x122xf32, #tpu.memory_space<vmem>>, vector<8x100xf32>
    %c32_220 = arith.constant 32 : index
    %c0_221 = arith.constant 0 : index
    %194 = vector.load %arg13[%c32_220, %c0_221] : memref<72x100xf32, #tpu.memory_space<vmem>>, vector<8x100xf32>
    tpu.vector_store %arg13[%c32_220, %c0_221], %193 {strides = array<i32>} : memref<72x100xf32, #tpu.memory_space<vmem>>, vector<8x100xf32>,
    %c0_222 = arith.constant 0 : index
    %c12_223 = arith.constant 12 : index
    %195 = vector.load %arg11[%c0_222, %c12_223] : memref<8x122xf32, #tpu.memory_space<vmem>>, vector<8x100xf32>
    %c40_224 = arith.constant 40 : index
    %c0_225 = arith.constant 0 : index
    %196 = vector.load %arg13[%c40_224, %c0_225] : memref<72x100xf32, #tpu.memory_space<vmem>>, vector<8x100xf32>
    tpu.vector_store %arg13[%c40_224, %c0_225], %195 {strides = array<i32>} : memref<72x100xf32, #tpu.memory_space<vmem>>, vector<8x100xf32>,
    %c0_226 = arith.constant 0 : index
    %c20_227 = arith.constant 20 : index
    %197 = vector.load %arg11[%c0_226, %c20_227] : memref<8x122xf32, #tpu.memory_space<vmem>>, vector<8x100xf32>
    %c48_228 = arith.constant 48 : index
    %c0_229 = arith.constant 0 : index
    %198 = vector.load %arg13[%c48_228, %c0_229] : memref<72x100xf32, #tpu.memory_space<vmem>>, vector<8x100xf32>
    tpu.vector_store %arg13[%c48_228, %c0_229], %197 {strides = array<i32>} : memref<72x100xf32, #tpu.memory_space<vmem>>, vector<8x100xf32>,
    %c0_230 = arith.constant 0 : index
    %c21_231 = arith.constant 21 : index
    %199 = vector.load %arg11[%c0_230, %c21_231] : memref<8x122xf32, #tpu.memory_space<vmem>>, vector<8x100xf32>
    %c56_232 = arith.constant 56 : index
    %c0_233 = arith.constant 0 : index
    %200 = vector.load %arg13[%c56_232, %c0_233] : memref<72x100xf32, #tpu.memory_space<vmem>>, vector<8x100xf32>
    tpu.vector_store %arg13[%c56_232, %c0_233], %199 {strides = array<i32>} : memref<72x100xf32, #tpu.memory_space<vmem>>, vector<8x100xf32>,
    %c0_234 = arith.constant 0 : index
    %c22_235 = arith.constant 22 : index
    %201 = vector.load %arg11[%c0_234, %c22_235] : memref<8x122xf32, #tpu.memory_space<vmem>>, vector<8x100xf32>
    %c64_236 = arith.constant 64 : index
    %c0_237 = arith.constant 0 : index
    %202 = vector.load %arg13[%c64_236, %c0_237] : memref<72x100xf32, #tpu.memory_space<vmem>>, vector<8x100xf32>
    tpu.vector_store %arg13[%c64_236, %c0_237], %201 {strides = array<i32>} : memref<72x100xf32, #tpu.memory_space<vmem>>, vector<8x100xf32>,
    %c0_238 = arith.constant 0 : index
    %c0_239 = arith.constant 0 : index
    %203 = vector.load %arg13[%c0_238, %c0_239] : memref<72x100xf32, #tpu.memory_space<vmem>>, vector<72x100xf32>
    %cst_240 = arith.constant dense<0.000000e+00> : vector<8x100xf32>
    %204 = tpu.matmul %177, %203, %cst_240 {dimension_numbers = #tpu.dot_dimension_numbers<[1], [0], [0], [1], [0, 0, 1, 1], [], []>} : vector<8x72xf32>, vector<72x100xf32>, vector<8x100xf32> -> vector<8x100xf32>
    %205 = vector.broadcast %179 : vector<8x1xf32> to vector<8x100xf32>
    %206 = arith.mulf %204, %205 : vector<8x100xf32>
    %207 = vector.broadcast %181 : vector<8x1xf32> to vector<8x100xf32>
    %208 = arith.addf %206, %207 : vector<8x100xf32>
    %cst_241 = arith.constant 0.000000e+00 : f32
    %209 = vector.shape_cast %13 : vector<1x100xi1> to vector<1x100xi1>
    %210 = vector.broadcast %209 : vector<1x100xi1> to vector<8x100xi1>
    %211 = vector.broadcast %cst_241 : f32 to vector<8x100xf32>
    %212 = arith.select %210, %208, %211 : vector<8x100xi1>, vector<8x100xf32>
    %c3_242 = arith.constant 3 : index
    %c0_243 = arith.constant 0 : index
    %c0_244 = arith.constant 0 : index
    %213 = vector.load %arg3[%c3_242, %c0_243, %c0_244] : memref<4x8x72xf32, #tpu.memory_space<vmem>>, vector<1x8x72xf32>
    %214 = vector.shape_cast %213 : vector<1x8x72xf32> to vector<8x72xf32>
    %c4 = arith.constant 4 : index
    %c0_245 = arith.constant 0 : index
    %c0_246 = arith.constant 0 : index
    %215 = vector.load %arg4[%c4, %c0_245, %c0_246] : memref<5x8x1xf32, #tpu.memory_space<vmem>>, vector<1x8x1xf32>
    %216 = vector.shape_cast %215 : vector<1x8x1xf32> to vector<8x1xf32>
    %c4_247 = arith.constant 4 : index
    %c0_248 = arith.constant 0 : index
    %c0_249 = arith.constant 0 : index
    %217 = vector.load %arg5[%c4_247, %c0_248, %c0_249] : memref<5x8x1xf32, #tpu.memory_space<vmem>>, vector<1x8x1xf32>
    %218 = vector.shape_cast %217 : vector<1x8x1xf32> to vector<8x1xf32>
    %cst_250 = arith.constant 0.000000e+00 : f32
    %219 = vector.broadcast %cst_250 : f32 to vector<8x100xf32>
    %220 = arith.maximumf %212, %219 : vector<8x100xf32>
    %c0_251 = arith.constant 0 : index
    %c11_252 = arith.constant 11 : index
    %221 = vector.load %arg11[%c0_251, %c11_252] : memref<8x122xf32, #tpu.memory_space<vmem>>, vector<8x100xf32>
    tpu.vector_store %arg11[%c0_251, %c11_252], %220 {strides = array<i32>} : memref<8x122xf32, #tpu.memory_space<vmem>>, vector<8x100xf32>,
    %c0_253 = arith.constant 0 : index
    %c0_254 = arith.constant 0 : index
    %222 = vector.load %arg11[%c0_253, %c0_254] : memref<8x122xf32, #tpu.memory_space<vmem>>, vector<8x100xf32>
    %c0_255 = arith.constant 0 : index
    %c0_256 = arith.constant 0 : index
    %223 = vector.load %arg13[%c0_255, %c0_256] : memref<72x100xf32, #tpu.memory_space<vmem>>, vector<8x100xf32>
    tpu.vector_store %arg13[%c0_255, %c0_256], %222 {strides = array<i32>} : memref<72x100xf32, #tpu.memory_space<vmem>>, vector<8x100xf32>,
    %c0_257 = arith.constant 0 : index
    %c1_258 = arith.constant 1 : index
    %224 = vector.load %arg11[%c0_257, %c1_258] : memref<8x122xf32, #tpu.memory_space<vmem>>, vector<8x100xf32>
    %c8_259 = arith.constant 8 : index
    %c0_260 = arith.constant 0 : index
    %225 = vector.load %arg13[%c8_259, %c0_260] : memref<72x100xf32, #tpu.memory_space<vmem>>, vector<8x100xf32>
    tpu.vector_store %arg13[%c8_259, %c0_260], %224 {strides = array<i32>} : memref<72x100xf32, #tpu.memory_space<vmem>>, vector<8x100xf32>,
    %c0_261 = arith.constant 0 : index
    %c2_262 = arith.constant 2 : index
    %226 = vector.load %arg11[%c0_261, %c2_262] : memref<8x122xf32, #tpu.memory_space<vmem>>, vector<8x100xf32>
    %c16_263 = arith.constant 16 : index
    %c0_264 = arith.constant 0 : index
    %227 = vector.load %arg13[%c16_263, %c0_264] : memref<72x100xf32, #tpu.memory_space<vmem>>, vector<8x100xf32>
    tpu.vector_store %arg13[%c16_263, %c0_264], %226 {strides = array<i32>} : memref<72x100xf32, #tpu.memory_space<vmem>>, vector<8x100xf32>,
    %c0_265 = arith.constant 0 : index
    %c10_266 = arith.constant 10 : index
    %228 = vector.load %arg11[%c0_265, %c10_266] : memref<8x122xf32, #tpu.memory_space<vmem>>, vector<8x100xf32>
    %c24_267 = arith.constant 24 : index
    %c0_268 = arith.constant 0 : index
    %229 = vector.load %arg13[%c24_267, %c0_268] : memref<72x100xf32, #tpu.memory_space<vmem>>, vector<8x100xf32>
    tpu.vector_store %arg13[%c24_267, %c0_268], %228 {strides = array<i32>} : memref<72x100xf32, #tpu.memory_space<vmem>>, vector<8x100xf32>,
    %c0_269 = arith.constant 0 : index
    %c11_270 = arith.constant 11 : index
    %230 = vector.load %arg11[%c0_269, %c11_270] : memref<8x122xf32, #tpu.memory_space<vmem>>, vector<8x100xf32>
    %c32_271 = arith.constant 32 : index
    %c0_272 = arith.constant 0 : index
    %231 = vector.load %arg13[%c32_271, %c0_272] : memref<72x100xf32, #tpu.memory_space<vmem>>, vector<8x100xf32>
    tpu.vector_store %arg13[%c32_271, %c0_272], %230 {strides = array<i32>} : memref<72x100xf32, #tpu.memory_space<vmem>>, vector<8x100xf32>,
    %c0_273 = arith.constant 0 : index
    %c12_274 = arith.constant 12 : index
    %232 = vector.load %arg11[%c0_273, %c12_274] : memref<8x122xf32, #tpu.memory_space<vmem>>, vector<8x100xf32>
    %c40_275 = arith.constant 40 : index
    %c0_276 = arith.constant 0 : index
    %233 = vector.load %arg13[%c40_275, %c0_276] : memref<72x100xf32, #tpu.memory_space<vmem>>, vector<8x100xf32>
    tpu.vector_store %arg13[%c40_275, %c0_276], %232 {strides = array<i32>} : memref<72x100xf32, #tpu.memory_space<vmem>>, vector<8x100xf32>,
    %c0_277 = arith.constant 0 : index
    %c20_278 = arith.constant 20 : index
    %234 = vector.load %arg11[%c0_277, %c20_278] : memref<8x122xf32, #tpu.memory_space<vmem>>, vector<8x100xf32>
    %c48_279 = arith.constant 48 : index
    %c0_280 = arith.constant 0 : index
    %235 = vector.load %arg13[%c48_279, %c0_280] : memref<72x100xf32, #tpu.memory_space<vmem>>, vector<8x100xf32>
    tpu.vector_store %arg13[%c48_279, %c0_280], %234 {strides = array<i32>} : memref<72x100xf32, #tpu.memory_space<vmem>>, vector<8x100xf32>,
    %c0_281 = arith.constant 0 : index
    %c21_282 = arith.constant 21 : index
    %236 = vector.load %arg11[%c0_281, %c21_282] : memref<8x122xf32, #tpu.memory_space<vmem>>, vector<8x100xf32>
    %c56_283 = arith.constant 56 : index
    %c0_284 = arith.constant 0 : index
    %237 = vector.load %arg13[%c56_283, %c0_284] : memref<72x100xf32, #tpu.memory_space<vmem>>, vector<8x100xf32>
    tpu.vector_store %arg13[%c56_283, %c0_284], %236 {strides = array<i32>} : memref<72x100xf32, #tpu.memory_space<vmem>>, vector<8x100xf32>,
    %c0_285 = arith.constant 0 : index
    %c22_286 = arith.constant 22 : index
    %238 = vector.load %arg11[%c0_285, %c22_286] : memref<8x122xf32, #tpu.memory_space<vmem>>, vector<8x100xf32>
    %c64_287 = arith.constant 64 : index
    %c0_288 = arith.constant 0 : index
    %239 = vector.load %arg13[%c64_287, %c0_288] : memref<72x100xf32, #tpu.memory_space<vmem>>, vector<8x100xf32>
    tpu.vector_store %arg13[%c64_287, %c0_288], %238 {strides = array<i32>} : memref<72x100xf32, #tpu.memory_space<vmem>>, vector<8x100xf32>,
    %c0_289 = arith.constant 0 : index
    %c0_290 = arith.constant 0 : index
    %240 = vector.load %arg13[%c0_289, %c0_290] : memref<72x100xf32, #tpu.memory_space<vmem>>, vector<72x100xf32>
    %cst_291 = arith.constant dense<0.000000e+00> : vector<8x100xf32>
    %241 = tpu.matmul %214, %240, %cst_291 {dimension_numbers = #tpu.dot_dimension_numbers<[1], [0], [0], [1], [0, 0, 1, 1], [], []>} : vector<8x72xf32>, vector<72x100xf32>, vector<8x100xf32> -> vector<8x100xf32>
    %242 = vector.broadcast %216 : vector<8x1xf32> to vector<8x100xf32>
    %243 = arith.mulf %241, %242 : vector<8x100xf32>
    %244 = vector.broadcast %218 : vector<8x1xf32> to vector<8x100xf32>
    %245 = arith.addf %243, %244 : vector<8x100xf32>
    %cst_292 = arith.constant 0.000000e+00 : f32
    %246 = vector.shape_cast %13 : vector<1x100xi1> to vector<1x100xi1>
    %247 = vector.broadcast %246 : vector<1x100xi1> to vector<8x100xi1>
    %248 = vector.broadcast %cst_292 : f32 to vector<8x100xf32>
    %249 = arith.select %247, %245, %248 : vector<8x100xi1>, vector<8x100xf32>
    %250 = arith.addf %249, %175 : vector<8x100xf32>
    %251 = vector.extract_strided_slice %250 {offsets = [0, 11], sizes = [8, 8], strides = [1, 1]} : vector<8x100xf32> to vector<8x8xf32>
    %c0_293 = arith.constant 0 : index
    %c0_294 = arith.constant 0 : index
    %c0_295 = arith.constant 0 : index
    %252 = vector.load %arg9[%c0_293, %c0_294, %c0_295] : memref<1x8x64xf32, #tpu.memory_space<vmem>>, vector<1x8x8xf32>
    %253 = vector.shape_cast %252 : vector<1x8x8xf32> to vector<8x8xf32>
    %254 = vector.shape_cast %251 : vector<8x8xf32> to vector<1x8x8xf32>
    tpu.vector_store %arg9[%c0_293, %c0_294, %c0_295], %254 {strides = array<i32>} : memref<1x8x64xf32, #tpu.memory_space<vmem>>, vector<1x8x8xf32>,
    %255 = vector.extract_strided_slice %250 {offsets = [0, 21], sizes = [8, 8], strides = [1, 1]} : vector<8x100xf32> to vector<8x8xf32>
    %c0_296 = arith.constant 0 : index
    %c0_297 = arith.constant 0 : index
    %c8_298 = arith.constant 8 : index
    %256 = vector.load %arg9[%c0_296, %c0_297, %c8_298] : memref<1x8x64xf32, #tpu.memory_space<vmem>>, vector<1x8x8xf32>
    %257 = vector.shape_cast %256 : vector<1x8x8xf32> to vector<8x8xf32>
    %258 = vector.shape_cast %255 : vector<8x8xf32> to vector<1x8x8xf32>
    tpu.vector_store %arg9[%c0_296, %c0_297, %c8_298], %258 {strides = array<i32>} : memref<1x8x64xf32, #tpu.memory_space<vmem>>, vector<1x8x8xf32>,
    %259 = vector.extract_strided_slice %250 {offsets = [0, 31], sizes = [8, 8], strides = [1, 1]} : vector<8x100xf32> to vector<8x8xf32>
    %c0_299 = arith.constant 0 : index
    %c0_300 = arith.constant 0 : index
    %c16_301 = arith.constant 16 : index
    %260 = vector.load %arg9[%c0_299, %c0_300, %c16_301] : memref<1x8x64xf32, #tpu.memory_space<vmem>>, vector<1x8x8xf32>
    %261 = vector.shape_cast %260 : vector<1x8x8xf32> to vector<8x8xf32>
    %262 = vector.shape_cast %259 : vector<8x8xf32> to vector<1x8x8xf32>
    tpu.vector_store %arg9[%c0_299, %c0_300, %c16_301], %262 {strides = array<i32>} : memref<1x8x64xf32, #tpu.memory_space<vmem>>, vector<1x8x8xf32>,
    %263 = vector.extract_strided_slice %250 {offsets = [0, 41], sizes = [8, 8], strides = [1, 1]} : vector<8x100xf32> to vector<8x8xf32>
    %c0_302 = arith.constant 0 : index
    %c0_303 = arith.constant 0 : index
    %c24_304 = arith.constant 24 : index
    %264 = vector.load %arg9[%c0_302, %c0_303, %c24_304] : memref<1x8x64xf32, #tpu.memory_space<vmem>>, vector<1x8x8xf32>
    %265 = vector.shape_cast %264 : vector<1x8x8xf32> to vector<8x8xf32>
    %266 = vector.shape_cast %263 : vector<8x8xf32> to vector<1x8x8xf32>
    tpu.vector_store %arg9[%c0_302, %c0_303, %c24_304], %266 {strides = array<i32>} : memref<1x8x64xf32, #tpu.memory_space<vmem>>, vector<1x8x8xf32>,
    %267 = vector.extract_strided_slice %250 {offsets = [0, 51], sizes = [8, 8], strides = [1, 1]} : vector<8x100xf32> to vector<8x8xf32>
    %c0_305 = arith.constant 0 : index
    %c0_306 = arith.constant 0 : index
    %c32_307 = arith.constant 32 : index
    %268 = vector.load %arg9[%c0_305, %c0_306, %c32_307] : memref<1x8x64xf32, #tpu.memory_space<vmem>>, vector<1x8x8xf32>
    %269 = vector.shape_cast %268 : vector<1x8x8xf32> to vector<8x8xf32>
    %270 = vector.shape_cast %267 : vector<8x8xf32> to vector<1x8x8xf32>
    tpu.vector_store %arg9[%c0_305, %c0_306, %c32_307], %270 {strides = array<i32>} : memref<1x8x64xf32, #tpu.memory_space<vmem>>, vector<1x8x8xf32>,
    %271 = vector.extract_strided_slice %250 {offsets = [0, 61], sizes = [8, 8], strides = [1, 1]} : vector<8x100xf32> to vector<8x8xf32>
    %c0_308 = arith.constant 0 : index
    %c0_309 = arith.constant 0 : index
    %c40_310 = arith.constant 40 : index
    %272 = vector.load %arg9[%c0_308, %c0_309, %c40_310] : memref<1x8x64xf32, #tpu.memory_space<vmem>>, vector<1x8x8xf32>
    %273 = vector.shape_cast %272 : vector<1x8x8xf32> to vector<8x8xf32>
    %274 = vector.shape_cast %271 : vector<8x8xf32> to vector<1x8x8xf32>
    tpu.vector_store %arg9[%c0_308, %c0_309, %c40_310], %274 {strides = array<i32>} : memref<1x8x64xf32, #tpu.memory_space<vmem>>, vector<1x8x8xf32>,
    %275 = vector.extract_strided_slice %250 {offsets = [0, 71], sizes = [8, 8], strides = [1, 1]} : vector<8x100xf32> to vector<8x8xf32>
    %c0_311 = arith.constant 0 : index
    %c0_312 = arith.constant 0 : index
    %c48_313 = arith.constant 48 : index
    %276 = vector.load %arg9[%c0_311, %c0_312, %c48_313] : memref<1x8x64xf32, #tpu.memory_space<vmem>>, vector<1x8x8xf32>
    %277 = vector.shape_cast %276 : vector<1x8x8xf32> to vector<8x8xf32>
    %278 = vector.shape_cast %275 : vector<8x8xf32> to vector<1x8x8xf32>
    tpu.vector_store %arg9[%c0_311, %c0_312, %c48_313], %278 {strides = array<i32>} : memref<1x8x64xf32, #tpu.memory_space<vmem>>, vector<1x8x8xf32>,
    %279 = vector.extract_strided_slice %250 {offsets = [0, 81], sizes = [8, 8], strides = [1, 1]} : vector<8x100xf32> to vector<8x8xf32>
    %c0_314 = arith.constant 0 : index
    %c0_315 = arith.constant 0 : index
    %c56_316 = arith.constant 56 : index
    %280 = vector.load %arg9[%c0_314, %c0_315, %c56_316] : memref<1x8x64xf32, #tpu.memory_space<vmem>>, vector<1x8x8xf32>
    %281 = vector.shape_cast %280 : vector<1x8x8xf32> to vector<8x8xf32>
    %282 = vector.shape_cast %279 : vector<8x8xf32> to vector<1x8x8xf32>
    tpu.vector_store %arg9[%c0_314, %c0_315, %c56_316], %282 {strides = array<i32>} : memref<1x8x64xf32, #tpu.memory_space<vmem>>, vector<1x8x8xf32>,
    return
  }
  func.func @transform_0(%arg0: i32) -> (i32, i32, i32) {
    %c0_i32 = arith.constant 0 : i32
    %c0_i32_0 = arith.constant 0 : i32
    %c0_i32_1 = arith.constant 0 : i32
    return %arg0, %c0_i32, %c0_i32_0 : i32, i32, i32
  }
  func.func @transform_1(%arg0: i32) -> (i32, i32) {
    %c0_i32 = arith.constant 0 : i32
    %c0_i32_0 = arith.constant 0 : i32
    %c0_i32_1 = arith.constant 0 : i32
    return %c0_i32, %c0_i32_0 : i32, i32
  }
  func.func @transform_2(%arg0: i32) -> (i32, i32, i32) {
    %c0_i32 = arith.constant 0 : i32
    %c0_i32_0 = arith.constant 0 : i32
    %c0_i32_1 = arith.constant 0 : i32
    %c0_i32_2 = arith.constant 0 : i32
    return %c0_i32, %c0_i32_0, %c0_i32_1 : i32, i32, i32
  }
  func.func @transform_3(%arg0: i32) -> (i32, i32, i32) {
    %c0_i32 = arith.constant 0 : i32
    %c0_i32_0 = arith.constant 0 : i32
    %c0_i32_1 = arith.constant 0 : i32
    %c0_i32_2 = arith.constant 0 : i32
    return %c0_i32, %c0_i32_0, %c0_i32_1 : i32, i32, i32
  }
  func.func @transform_4(%arg0: i32) -> (i32, i32, i32) {
    %c0_i32 = arith.constant 0 : i32
    %c0_i32_0 = arith.constant 0 : i32
    %c0_i32_1 = arith.constant 0 : i32
    %c0_i32_2 = arith.constant 0 : i32
    return %c0_i32, %c0_i32_0, %c0_i32_1 : i32, i32, i32
  }
  func.func @transform_5(%arg0: i32) -> (i32, i32) {
    %c0_i32 = arith.constant 0 : i32
    %c0_i32_0 = arith.constant 0 : i32
    %c0_i32_1 = arith.constant 0 : i32
    return %c0_i32, %c0_i32_0 : i32, i32
  }
  func.func @transform_6(%arg0: i32) -> (i32, i32) {
    %c0_i32 = arith.constant 0 : i32
    %c0_i32_0 = arith.constant 0 : i32
    %c0_i32_1 = arith.constant 0 : i32
    return %c0_i32, %c0_i32_0 : i32, i32
  }
  func.func @transform_7(%arg0: i32) -> (i32, i32) {
    %c0_i32 = arith.constant 0 : i32
    %c0_i32_0 = arith.constant 0 : i32
    %c0_i32_1 = arith.constant 0 : i32
    return %c0_i32, %c0_i32_0 : i32, i32
  }
  func.func @transform_8(%arg0: i32) -> (i32, i32, i32) {
    %c0_i32 = arith.constant 0 : i32
    %c0_i32_0 = arith.constant 0 : i32
    %c0_i32_1 = arith.constant 0 : i32
    return %arg0, %c0_i32, %c0_i32_0 : i32, i32, i32
  }
}

</mosaic_0001>

<llo_original>
// kernel: conv_sequence_forward.1
$region0: #{conv_sequence_forward.1}
  #allocation0 [shape = 'u32[]', space=smem, size = 0x4, offset = 0x4, fixed_abs, tag = 'smem constant byte address 0x4 - core index']
  #allocation1 [shape = 'u32[144,128]{1,0:T(1,128)}', space=vmem, size = 0x12000, scoped, tag = 'internal scratch']
  #allocation2 [shape = 'f32[8,362]{1,0:T(8,128)}', space=vmem, size = 0x3000, scoped, tag = 'scratch operand']
  #allocation3 [shape = 'f32[8,122]{1,0:T(8,128)}', space=vmem, size = 0x1000, scoped, tag = 'scratch operand']
  #allocation4 [shape = 'f32[72,324]{1,0:T(8,128)}', space=vmem, size = 0x1b000, scoped, tag = 'scratch operand']
  #allocation5 [shape = 'f32[72,100]{1,0:T(8,128)}', space=vmem, size = 0x9000, scoped, tag = 'scratch operand']
  %s0 = inlined_call_operand.vmem [shape: f32[2,4,256], index: 0, kind: input, shape index: {}]
  %s1 = inlined_call_operand.vmem [shape: f32[8,72], index: 1, kind: input, shape index: {}]
  %s2 = inlined_call_operand.vmem [shape: f32[4,8,72], index: 2, kind: input, shape index: {}]
  %s3 = inlined_call_operand.vmem [shape: f32[5,8,1], index: 3, kind: input, shape index: {}]
  %s4 = inlined_call_operand.vmem [shape: f32[5,8,1], index: 4, kind: input, shape index: {}]
  %s5 = inlined_call_operand.vmem [shape: f32[1,324], index: 5, kind: input, shape index: {}]
  %s6 = inlined_call_operand.vmem [shape: f32[1,100], index: 6, kind: input, shape index: {}]
  %s7 = inlined_call_operand.vmem [shape: f32[324,100], index: 7, kind: input, shape index: {}]
  %s8 = inlined_call_operand.vmem [shape: f32[2,8,64], index: 8, kind: output, shape index: {}]
  %s9 = sld [smem:[#allocation0]]
  $region65: #{conv_sequence_forward.1} parent=0
    _
  %s11 = ssub.s32 1, %s9
  %s12 = scalar_select 0, %s11, %s9
  loop: start=0, step=1, limit=4
  $region2: #{conv_sequence_forward.1} parent=0 // loop_pre_header
    _
  $region3: #{conv_sequence_forward.1} parent=0 // loop_header
    %s14 = sphi 0, %s18
    %p15 = scmp.ge.s32.totalorder %s14, 4
    %s24 = sphi 0, %s26
    %s27 = sphi 0, %s24
    %s28 = sphi 0, %s27
    %s44 = sphi 0, %s28
    %s48 = sphi 0, %s48
    %s50 = sphi 0, %s48
    %s51 = sphi 0, %s50
    %s65 = sphi 0, %s51
    %s69 = sphi 0, %s69
    %s71 = sphi 0, %s69
    %s72 = sphi 0, %s71
    %s86 = sphi 0, %s72
    %s90 = sphi 0, %s90
    %s92 = sphi 0, %s90
    %s93 = sphi 0, %s92
    %s107 = sphi 0, %s93
    %s111 = sphi 0, %s111
    %s113 = sphi 0, %s111
    %s114 = sphi 0, %s113
    %s128 = sphi 0, %s114
    %s132 = sphi 0, %s132
    %s134 = sphi 0, %s132
    %s135 = sphi 0, %s134
    %s149 = sphi 0, %s135
    %s153 = sphi 0, %s153
    %s155 = sphi 0, %s153
    %s156 = sphi 0, %s155
    %s170 = sphi 0, %s156
    %s174 = sphi 0, %s174
    %s176 = sphi 0, %s174
    %s177 = sphi 0, %s176
    %s191 = sphi 0, %s177
    %s197 = sphi 0, %s199
    %s200 = sphi 0, %s197
    %s201 = sphi 0, %s200
    %s217 = sphi 0, %s201
  $region4: #{conv_sequence_forward.1} parent=0 // loop_header_branch
    %17 = sbr.rel (%p15) target = $region8
  $region5: #{conv_sequence_forward.1} parent=0 // loop_body
    %s19 = ssub.s32 %s14, 1
    %s20 = ssub.s32 %s14, 2
    %s21 = sadd.s32 %s14, 1
    %s22 = ssub.s32 %s14, %s21
    %p23 = scmp.eq.s32.totalorder %s22, 0
    %s25 = sadd.s32 %s24, 1
    %s26 = scalar_select %p23, %s24, %s25
    %p29 = pneg %p23
    %p30 = scmp.eq.s32.totalorder %s14, 1
    %p31 = por %p29, %p30
    %p32 = scmp.ne.s32.totalorder %s24, %s27
    %p33 = scmp.eq.s32.totalorder %s14, 0
    %p34 = por %p32, %p33
    %p35 = scmp.ne.s32.totalorder %s24, %s27
    %p36 = scmp.eq.s32.totalorder %s19, 1
    %p37 = por %p35, %p36
    %p38 = scmp.ne.s32.totalorder %s27, %s28
    %p39 = scmp.eq.s32.totalorder %s19, 0
    %p40 = por %p38, %p39
    %p41 = scmp.ne.s32.totalorder %s27, %s28
    %p42 = scmp.eq.s32.totalorder %s20, 1
    %p43 = por %p41, %p42
    %p45 = scmp.ne.s32.totalorder %s28, %s44
    %p46 = scmp.eq.s32.totalorder %s20, 0
    %p47 = por %p45, %p46
    %s49 = sadd.s32 %s48, 1
    %p52 = scmp.eq.s32.totalorder %s14, 1
    %p53 = scmp.ne.s32.totalorder %s48, %s50
    %p54 = scmp.eq.s32.totalorder %s14, 0
    %p55 = por %p53, %p54
    %p56 = scmp.ne.s32.totalorder %s48, %s50
    %p57 = scmp.eq.s32.totalorder %s19, 1
    %p58 = por %p56, %p57
    %p59 = scmp.ne.s32.totalorder %s50, %s51
    %p60 = scmp.eq.s32.totalorder %s19, 0
    %p61 = por %p59, %p60
    %p62 = scmp.ne.s32.totalorder %s50, %s51
    %p63 = scmp.eq.s32.totalorder %s20, 1
    %p64 = por %p62, %p63
    %p66 = scmp.ne.s32.totalorder %s51, %s65
    %p67 = scmp.eq.s32.totalorder %s20, 0
    %p68 = por %p66, %p67
    %s70 = sadd.s32 %s69, 1
    %p73 = scmp.eq.s32.totalorder %s14, 1
    %p74 = scmp.ne.s32.totalorder %s69, %s71
    %p75 = scmp.eq.s32.totalorder %s14, 0
    %p76 = por %p74, %p75
    %p77 = scmp.ne.s32.totalorder %s69, %s71
    %p78 = scmp.eq.s32.totalorder %s19, 1
    %p79 = por %p77, %p78
    %p80 = scmp.ne.s32.totalorder %s71, %s72
    %p81 = scmp.eq.s32.totalorder %s19, 0
    %p82 = por %p80, %p81
    %p83 = scmp.ne.s32.totalorder %s71, %s72
    %p84 = scmp.eq.s32.totalorder %s20, 1
    %p85 = por %p83, %p84
    %p87 = scmp.ne.s32.totalorder %s72, %s86
    %p88 = scmp.eq.s32.totalorder %s20, 0
    %p89 = por %p87, %p88
    %s91 = sadd.s32 %s90, 1
    %p94 = scmp.eq.s32.totalorder %s14, 1
    %p95 = scmp.ne.s32.totalorder %s90, %s92
    %p96 = scmp.eq.s32.totalorder %s14, 0
    %p97 = por %p95, %p96
    %p98 = scmp.ne.s32.totalorder %s90, %s92
    %p99 = scmp.eq.s32.totalorder %s19, 1
    %p100 = por %p98, %p99
    %p101 = scmp.ne.s32.totalorder %s92, %s93
    %p102 = scmp.eq.s32.totalorder %s19, 0
    %p103 = por %p101, %p102
    %p104 = scmp.ne.s32.totalorder %s92, %s93
    %p105 = scmp.eq.s32.totalorder %s20, 1
    %p106 = por %p104, %p105
    %p108 = scmp.ne.s32.totalorder %s93, %s107
    %p109 = scmp.eq.s32.totalorder %s20, 0
    %p110 = por %p108, %p109
    %s112 = sadd.s32 %s111, 1
    %p115 = scmp.eq.s32.totalorder %s14, 1
    %p116 = scmp.ne.s32.totalorder %s111, %s113
    %p117 = scmp.eq.s32.totalorder %s14, 0
    %p118 = por %p116, %p117
    %p119 = scmp.ne.s32.totalorder %s111, %s113
    %p120 = scmp.eq.s32.totalorder %s19, 1
    %p121 = por %p119, %p120
    %p122 = scmp.ne.s32.totalorder %s113, %s114
    %p123 = scmp.eq.s32.totalorder %s19, 0
    %p124 = por %p122, %p123
    %p125 = scmp.ne.s32.totalorder %s113, %s114
    %p126 = scmp.eq.s32.totalorder %s20, 1
    %p127 = por %p125, %p126
    %p129 = scmp.ne.s32.totalorder %s114, %s128
    %p130 = scmp.eq.s32.totalorder %s20, 0
    %p131 = por %p129, %p130
    %s133 = sadd.s32 %s132, 1
    %p136 = scmp.eq.s32.totalorder %s14, 1
    %p137 = scmp.ne.s32.totalorder %s132, %s134
    %p138 = scmp.eq.s32.totalorder %s14, 0
    %p139 = por %p137, %p138
    %p140 = scmp.ne.s32.totalorder %s132, %s134
    %p141 = scmp.eq.s32.totalorder %s19, 1
    %p142 = por %p140, %p141
    %p143 = scmp.ne.s32.totalorder %s134, %s135
    %p144 = scmp.eq.s32.totalorder %s19, 0
    %p145 = por %p143, %p144
    %p146 = scmp.ne.s32.totalorder %s134, %s135
    %p147 = scmp.eq.s32.totalorder %s20, 1
    %p148 = por %p146, %p147
    %p150 = scmp.ne.s32.totalorder %s135, %s149
    %p151 = scmp.eq.s32.totalorder %s20, 0
    %p152 = por %p150, %p151
    %s154 = sadd.s32 %s153, 1
    %p157 = scmp.eq.s32.totalorder %s14, 1
    %p158 = scmp.ne.s32.totalorder %s153, %s155
    %p159 = scmp.eq.s32.totalorder %s14, 0
    %p160 = por %p158, %p159
    %p161 = scmp.ne.s32.totalorder %s153, %s155
    %p162 = scmp.eq.s32.totalorder %s19, 1
    %p163 = por %p161, %p162
    %p164 = scmp.ne.s32.totalorder %s155, %s156
    %p165 = scmp.eq.s32.totalorder %s19, 0
    %p166 = por %p164, %p165
    %p167 = scmp.ne.s32.totalorder %s155, %s156
    %p168 = scmp.eq.s32.totalorder %s20, 1
    %p169 = por %p167, %p168
    %p171 = scmp.ne.s32.totalorder %s156, %s170
    %p172 = scmp.eq.s32.totalorder %s20, 0
    %p173 = por %p171, %p172
    %s175 = sadd.s32 %s174, 1
    %p178 = scmp.eq.s32.totalorder %s14, 1
    %p179 = scmp.ne.s32.totalorder %s174, %s176
    %p180 = scmp.eq.s32.totalorder %s14, 0
    %p181 = por %p179, %p180
    %p182 = scmp.ne.s32.totalorder %s174, %s176
    %p183 = scmp.eq.s32.totalorder %s19, 1
    %p184 = por %p182, %p183
    %p185 = scmp.ne.s32.totalorder %s176, %s177
    %p186 = scmp.eq.s32.totalorder %s19, 0
    %p187 = por %p185, %p186
    %p188 = scmp.ne.s32.totalorder %s176, %s177
    %p189 = scmp.eq.s32.totalorder %s20, 1
    %p190 = por %p188, %p189
    %p192 = scmp.ne.s32.totalorder %s177, %s191
    %p193 = scmp.eq.s32.totalorder %s20, 0
    %p194 = por %p192, %p193
    %s195 = ssub.s32 %s14, %s21
    %p196 = scmp.eq.s32.totalorder %s195, 0
    %s198 = sadd.s32 %s197, 1
    %s199 = scalar_select %p196, %s197, %s198
    %p202 = pneg %p196
    %p203 = scmp.eq.s32.totalorder %s14, 1
    %p204 = por %p202, %p203
    %p205 = scmp.ne.s32.totalorder %s197, %s200
    %p206 = scmp.eq.s32.totalorder %s14, 0
    %p207 = por %p205, %p206
    %p208 = scmp.ne.s32.totalorder %s197, %s200
    %p209 = scmp.eq.s32.totalorder %s19, 1
    %p210 = por %p208, %p209
    %p211 = scmp.ne.s32.totalorder %s200, %s201
    %p212 = scmp.eq.s32.totalorder %s19, 0
    %p213 = por %p211, %p212
    %p214 = scmp.ne.s32.totalorder %s200, %s201
    %p215 = scmp.eq.s32.totalorder %s20, 1
    %p216 = por %p214, %p215
    %p218 = scmp.ne.s32.totalorder %s201, %s217
    %p219 = scmp.eq.s32.totalorder %s20, 0
    %p220 = por %p218, %p219
    %p221 = scmp.le.s32.totalorder 1, %s14
    %p222 = scmp.lt.s32.totalorder %s14, 3
    %p223 = pnand %p221, %p222
    %p224 = pneg %p223
    // Predicated region
    $region9: #{conv_sequence_forward.1} parent=5 // pred_check
      _
    $region10: #{conv_sequence_forward.1} parent=5 // pred_check_branch
      %226 = sbr.rel (%p223) target = $region12
    $region11: #{conv_sequence_forward.1} parent=5 // pred_region
      %s227 = ssub.s32 %s14, 1
      // Predicated region
      $region13: #{conv_sequence_forward.1} parent=11 // pred_check
        %p228 = pneg %p61
      $region14: #{conv_sequence_forward.1} parent=11 // pred_check_branch
        %230 = sbr.rel (%p228) target = $region16
      $region15: #{conv_sequence_forward.1} parent=11 // pred_region
        _
      $region16: #{conv_sequence_forward.1} parent=11 // pred_fallthru
        _
      // Predicated region
      $region17: #{conv_sequence_forward.1} parent=11 // pred_check
        %p231 = pneg %p82
      $region18: #{conv_sequence_forward.1} parent=11 // pred_check_branch
        %233 = sbr.rel (%p231) target = $region20
      $region19: #{conv_sequence_forward.1} parent=11 // pred_region
        _
      $region20: #{conv_sequence_forward.1} parent=11 // pred_fallthru
        _
      // Predicated region
      $region21: #{conv_sequence_forward.1} parent=11 // pred_check
        %p234 = pneg %p103
      $region22: #{conv_sequence_forward.1} parent=11 // pred_check_branch
        %236 = sbr.rel (%p234) target = $region24
      $region23: #{conv_sequence_forward.1} parent=11 // pred_region
        _
      $region24: #{conv_sequence_forward.1} parent=11 // pred_fallthru
        _
      // Predicated region
      $region25: #{conv_sequence_forward.1} parent=11 // pred_check
        %p237 = pneg %p124
      $region26: #{conv_sequence_forward.1} parent=11 // pred_check_branch
        %239 = sbr.rel (%p237) target = $region28
      $region27: #{conv_sequence_forward.1} parent=11 // pred_region
        _
      $region28: #{conv_sequence_forward.1} parent=11 // pred_fallthru
        _
      // Predicated region
      $region29: #{conv_sequence_forward.1} parent=11 // pred_check
        %p240 = pneg %p145
      $region30: #{conv_sequence_forward.1} parent=11 // pred_check_branch
        %242 = sbr.rel (%p240) target = $region32
      $region31: #{conv_sequence_forward.1} parent=11 // pred_region
        _
      $region32: #{conv_sequence_forward.1} parent=11 // pred_fallthru
        _
      // Predicated region
      $region33: #{conv_sequence_forward.1} parent=11 // pred_check
        %p243 = pneg %p166
      $region34: #{conv_sequence_forward.1} parent=11 // pred_check_branch
        %245 = sbr.rel (%p243) target = $region36
      $region35: #{conv_sequence_forward.1} parent=11 // pred_region
        _
      $region36: #{conv_sequence_forward.1} parent=11 // pred_fallthru
        _
      // Predicated region
      $region37: #{conv_sequence_forward.1} parent=11 // pred_check
        %p246 = pneg %p187
      $region38: #{conv_sequence_forward.1} parent=11 // pred_check_branch
        %248 = sbr.rel (%p246) target = $region40
      $region39: #{conv_sequence_forward.1} parent=11 // pred_region
        _
      $region40: #{conv_sequence_forward.1} parent=11 // pred_fallthru
        _
    $region12: #{conv_sequence_forward.1} parent=5 // pred_fallthru
      _
    %p249 = scmp.lt.s32.totalorder %s14, 2
    // Predicated region
    $region41: #{conv_sequence_forward.1} parent=5 // pred_check
      %p250 = pneg %p249
    $region42: #{conv_sequence_forward.1} parent=5 // pred_check_branch
      %252 = sbr.rel (%p250) target = $region44
    $region43: #{conv_sequence_forward.1} parent=5 // pred_region
      // Predicated region
      $region45: #{conv_sequence_forward.1} parent=43 // pred_check
        %p253 = pneg %p34
      $region46: #{conv_sequence_forward.1} parent=43 // pred_check_branch
        %255 = sbr.rel (%p253) target = $region48
      $region47: #{conv_sequence_forward.1} parent=43 // pred_region
        %p256 = scmp.lt.s32.totalorder %s14, 1
        %s257 = scalar_select %p256, %s14, 1
        %s258 = smul.addr %s257, 2
        %s259 = smul.addr %s258, 4
        %s260 = scalar_lea.vmem %s0, %s259
      $region48: #{conv_sequence_forward.1} parent=43 // pred_fallthru
        _
    $region44: #{conv_sequence_forward.1} parent=5 // pred_fallthru
      _
    %p261 = scmp.le.s32.totalorder 1, %s14
    %p262 = scmp.lt.s32.totalorder %s14, 3
    %p263 = pnand %p261, %p262
    %p264 = pneg %p263
    // Predicated region
    $region49: #{conv_sequence_forward.1} parent=5 // pred_check
      _
    $region50: #{conv_sequence_forward.1} parent=5 // pred_check_branch
      %266 = sbr.rel (%p263) target = $region52
    $region51: #{conv_sequence_forward.1} parent=5 // pred_region
      %s267 = ssub.s32 %s14, 1
      %p268 = scmp.lt.s32.totalorder %s19, 1
      %s269 = scalar_select %p268, %s19, 1
      %s270 = smul.addr %s269, 2
      %s271 = smul.addr %s270, 4
      %s272 = scalar_lea.vmem %s0, %s271
      %p273 = pneg %p40
      %p274 = pneg %p37
      %p275 = pneg %p61
      %p276 = pneg %p58
      %p277 = pneg %p82
      %p278 = pneg %p79
      %p279 = pneg %p103
      %p280 = pneg %p100
      %p281 = pneg %p124
      %p282 = pneg %p121
      %p283 = pneg %p145
      %p284 = pneg %p142
      %p285 = pneg %p166
      %p286 = pneg %p163
      %p287 = pneg %p187
      %p288 = pneg %p184
      %p289 = pneg %p213
      %p290 = pneg %p210
      %p291 = scmp.lt.s32.totalorder %s19, 1
      %s292 = scalar_select %p291, %s19, 1
      %s293 = smul.addr %s292, 8
      %s294 = scalar_lea.vmem %s8, %s293
      %p295 = scmp.lt.s32.totalorder %s19, 1
      %s296 = scalar_select %p295, %s19, 1
      %s297 = smul.addr %s296, 2
      %s298 = smul.addr %s297, 4
      %s299 = scalar_lea.vmem %s0, %s298
      %p300 = scmp.lt.s32.totalorder %s19, 1
      %s301 = scalar_select %p300, %s19, 1
      %s302 = smul.addr %s301, 8
      %s303 = scalar_lea.vmem %s8, %s302
      %304 = vst [vmem:[#allocation2] sm:$0xff] 0.0
      %305 = vst [vmem:[#allocation2 + $0x8] sm:$0xff] 0.0
      %vm306 = vcmask 867328
      %307 = vst.msk [vmem:[#allocation2 + $0x10] sm:$0xff] %vm306, 0.0
      %vm308 = vcmask 998400
      %309 = vst.msk [vmem:[#allocation3] sm:$0xff] %vm308, 0.0
      %310 = vst [vmem:[#allocation4] sm:$0xff] 0.0
      %311 = vst [vmem:[#allocation4 + $0x8] sm:$0xff] 0.0
      %vm312 = vcmask 556032
      %313 = vst.msk [vmem:[#allocation4 + $0x10] sm:$0xff] %vm312, 0.0
      %314 = vst [vmem:[#allocation4 + $0x18] sm:$0xff] 0.0
      %315 = vst [vmem:[#allocation4 + $0x20] sm:$0xff] 0.0
      %316 = vst.msk [vmem:[#allocation4 + $0x28] sm:$0xff] %vm312, 0.0
      %317 = vst [vmem:[#allocation4 + $0x30] sm:$0xff] 0.0
      %318 = vst [vmem:[#allocation4 + $0x38] sm:$0xff] 0.0
      %319 = vst.msk [vmem:[#allocation4 + $0x40] sm:$0xff] %vm312, 0.0
      %320 = vst [vmem:[#allocation4 + $0x48] sm:$0xff] 0.0
      %321 = vst [vmem:[#allocation4 + $0x50] sm:$0xff] 0.0
      %322 = vst.msk [vmem:[#allocation4 + $0x58] sm:$0xff] %vm312, 0.0
      %323 = vst [vmem:[#allocation4 + $0x60] sm:$0xff] 0.0
      %324 = vst [vmem:[#allocation4 + $0x68] sm:$0xff] 0.0
      %325 = vst.msk [vmem:[#allocation4 + $0x70] sm:$0xff] %vm312, 0.0
      %326 = vst [vmem:[#allocation4 + $0x78] sm:$0xff] 0.0
      %327 = vst [vmem:[#allocation4 + $0x80] sm:$0xff] 0.0
      %328 = vst.msk [vmem:[#allocation4 + $0x88] sm:$0xff] %vm312, 0.0
      %329 = vst [vmem:[#allocation4 + $0x90] sm:$0xff] 0.0
      %330 = vst [vmem:[#allocation4 + $0x98] sm:$0xff] 0.0
      %331 = vst.msk [vmem:[#allocation4 + $0xa0] sm:$0xff] %vm312, 0.0
      %332 = vst [vmem:[#allocation4 + $0xa8] sm:$0xff] 0.0
      %333 = vst [vmem:[#allocation4 + $0xb0] sm:$0xff] 0.0
      %334 = vst.msk [vmem:[#allocation4 + $0xb8] sm:$0xff] %vm312, 0.0
      %335 = vst [vmem:[#allocation4 + $0xc0] sm:$0xff] 0.0
      %336 = vst [vmem:[#allocation4 + $0xc8] sm:$0xff] 0.0
      %337 = vst.msk [vmem:[#allocation4 + $0xd0] sm:$0xff] %vm312, 0.0
      %vm338 = vcmask 818176
      %339 = vst.msk [vmem:[#allocation5] sm:$0xff] %vm338, 0.0
      %340 = vst.msk [vmem:[#allocation5 + $0x8] sm:$0xff] %vm338, 0.0
      %341 = vst.msk [vmem:[#allocation5 + $0x10] sm:$0xff] %vm338, 0.0
      %342 = vst.msk [vmem:[#allocation5 + $0x18] sm:$0xff] %vm338, 0.0
      %343 = vst.msk [vmem:[#allocation5 + $0x20] sm:$0xff] %vm338, 0.0
      %344 = vst.msk [vmem:[#allocation5 + $0x28] sm:$0xff] %vm338, 0.0
      %345 = vst.msk [vmem:[#allocation5 + $0x30] sm:$0xff] %vm338, 0.0
      %346 = vst.msk [vmem:[#allocation5 + $0x38] sm:$0xff] %vm338, 0.0
      %347 = vst.msk [vmem:[#allocation5 + $0x40] sm:$0xff] %vm338, 0.0
      %v348 = vld [vmem:[%s5] sm:$0x7]
      %vm349 = vcmp.gt.f32.partialorder %v348, 0.0
      %v350 = vld [vmem:[%s6] sm:$0x1]
      %vm351 = vcmp.gt.f32.partialorder %v350, 0.0
      %v352 = vld [vmem:[%s299] sm:$0xff]
      %354 = vrot.lane.b32.xlu0 %v352, 38
      %v355 = vpop.permute.xlu0 %354
      %vm357 = vcmask 437552
      %358 = vst.msk [vmem:[#allocation2] sm:$0xf] %vm357, %v355
      %359 = vrot.lane.b32.xlu0 %v352, 40
      %v360 = vpop.permute.xlu0 %359
      %vm362 = vcmask 585152
      %363 = vst.msk [vmem:[#allocation2] sm:$0xf] %vm362, %v360
      %364 = vrot.lane.b32.xlu0 %v352, 42
      %v365 = vpop.permute.xlu0 %364
      %vm367 = vcmask 732752
      %368 = vst.msk [vmem:[#allocation2] sm:$0xf] %vm367, %v365
      %369 = vrot.lane.b32.xlu0 %v352, 44
      %v370 = vpop.permute.xlu0 %369
      %vm372 = vcmask 880352
      %373 = vst.msk [vmem:[#allocation2] sm:$0xf] %vm372, %v370
      %374 = vrot.lane.b32.xlu0 %v352, 46
      %v375 = vpop.permute.xlu0 %374
      %vm377 = vcmask 1027952
      %378 = vst.msk [vmem:[#allocation2] sm:$0xf] %vm377, %v375
      %379 = vrot.lane.b32.xlu0 %v352, 48
      %v380 = vpop.permute.xlu0 %379
      %vm382 = vcmask 125952
      %383 = vst.msk [vmem:[#allocation2 + $0x8] sm:$0xf] %vm382, %v380
      %384 = vrot.lane.b32.xlu0 %v352, 50
      %v385 = vpop.permute.xlu0 %384
      %vm387 = vcmask 273552
      %388 = vst.msk [vmem:[#allocation2 + $0x8] sm:$0xf] %vm387, %v385
      %389 = vrot.lane.b32.xlu0 %v352, 52
      %v390 = vpop.permute.xlu0 %389
      %vm392 = vcmask 421152
      %393 = vst.msk [vmem:[#allocation2 + $0x8] sm:$0xf] %vm392, %v390
      %v394 = vcombine.high %v352, %v352
      %395 = vrot.lane.b32.xlu0 %v394, 54
      %v396 = vpop.permute.xlu0 %395
      %vm398 = vcmask 568752
      %399 = vst.msk [vmem:[#allocation2 + $0x8] sm:$0xf] %vm398, %v396
      %400 = vrot.lane.b32.xlu0 %v394, 56
      %v401 = vpop.permute.xlu0 %400
      %vm403 = vcmask 716352
      %404 = vst.msk [vmem:[#allocation2 + $0x8] sm:$0xf] %vm403, %v401
      %405 = vrot.lane.b32.xlu0 %v394, 58
      %v406 = vpop.permute.xlu0 %405
      %vm408 = vcmask 863952
      %409 = vst.msk [vmem:[#allocation2 + $0x8] sm:$0xf] %vm408, %v406
      %410 = vrot.lane.b32.xlu0 %v394, 60
      %v411 = vpop.permute.xlu0 %410
      %vm413 = vcmask 1011552
      %414 = vst.msk [vmem:[#allocation2 + $0x8] sm:$0xf] %vm413, %v411
      %415 = vrot.lane.b32.xlu0 %v394, 62
      %v416 = vpop.permute.xlu0 %415
      %vm418 = vcmask 1044464
      %419 = vst.msk [vmem:[#allocation2 + $0x8] sm:$0xf] %vm418, %v416
      %vm420 = vcmask 109568
      %421 = vst.msk [vmem:[#allocation2 + $0x10] sm:$0xf] %vm420, %v416
      %422 = vrot.lane.b32.xlu0 %v394, 64
      %v423 = vpop.permute.xlu0 %422
      %vm425 = vcmask 257152
      %426 = vst.msk [vmem:[#allocation2 + $0x10] sm:$0xf] %vm425, %v423
      %427 = vrot.lane.b32.xlu0 %v394, 66
      %v428 = vpop.permute.xlu0 %427
      %vm430 = vcmask 404752
      %431 = vst.msk [vmem:[#allocation2 + $0x10] sm:$0xf] %vm430, %v428
      %432 = vrot.lane.b32.xlu0 %v394, 68
      %v433 = vpop.permute.xlu0 %432
      %vm435 = vcmask 552352
      %436 = vst.msk [vmem:[#allocation2 + $0x10] sm:$0xf] %vm435, %v433
      %v437 = vld [vmem:[#allocation2] sm:$0xf]
      %v438 = vld [vmem:[#allocation2 + $0x8] sm:$0xf]
      %v439 = vld [vmem:[#allocation2 + $0x10] sm:$0xf]
      %440 = vst [vmem:[#allocation4] sm:$0xf] %v437
      %441 = vst [vmem:[#allocation4 + $0x8] sm:$0xf] %v438
      %vm442 = vcmask 551936
      %443 = vst.msk [vmem:[#allocation4 + $0x10] sm:$0xf] %vm442, %v439
      %v444 = vld [vmem:[#allocation2] sm:$0xf]
      %v445 = vld [vmem:[#allocation2 + $0x8] sm:$0xf]
      %v446 = vld [vmem:[#allocation2 + $0x10] sm:$0xf]
      %450 = vrot.lane.b32.xlu0 %v444, 127
      %v451 = vpop.permute.xlu0 %450
      %452 = vrot.lane.b32.xlu0 %v445, 127
      %v453 = vpop.permute.xlu0 %452
      %454 = vrot.lane.b32.xlu0 %v446, 127
      %v455 = vpop.permute.xlu0 %454
      %vm456 = vcmask 1039360
      %v457 = vsel %vm456, %v451, %v453
      %v458 = vsel %vm456, %v453, %v455
      %462 = vst [vmem:[#allocation4 + $0x18] sm:$0xf] %v457
      %463 = vst [vmem:[#allocation4 + $0x20] sm:$0xf] %v458
      %464 = vst.msk [vmem:[#allocation4 + $0x28] sm:$0xf] %vm442, %v455
      %v465 = vld [vmem:[#allocation2] sm:$0xf]
      %v466 = vld [vmem:[#allocation2 + $0x8] sm:$0xf]
      %v467 = vld [vmem:[#allocation2 + $0x10] sm:$0xf]
      %471 = vrot.lane.b32.xlu0 %v465, 126
      %v472 = vpop.permute.xlu0 %471
      %473 = vrot.lane.b32.xlu0 %v466, 126
      %v474 = vpop.permute.xlu0 %473
      %475 = vrot.lane.b32.xlu0 %v467, 126
      %v476 = vpop.permute.xlu0 %475
      %vm477 = vcmask 1031168
      %v478 = vsel %vm477, %v472, %v474
      %v479 = vsel %vm477, %v474, %v476
      %483 = vst [vmem:[#allocation4 + $0x30] sm:$0xf] %v478
      %484 = vst [vmem:[#allocation4 + $0x38] sm:$0xf] %v479
      %485 = vst.msk [vmem:[#allocation4 + $0x40] sm:$0xf] %vm442, %v476
      %v486 = vld [vmem:[#allocation2] sm:$0xf]
      %v487 = vld [vmem:[#allocation2 + $0x8] sm:$0xf]
      %v488 = vld [vmem:[#allocation2 + $0x10] sm:$0xf]
      %492 = vrot.lane.b32.xlu0 %v486, 110
      %v493 = vpop.permute.xlu0 %492
      %494 = vrot.lane.b32.xlu0 %v487, 110
      %v495 = vpop.permute.xlu0 %494
      %496 = vrot.lane.b32.xlu0 %v488, 110
      %v497 = vpop.permute.xlu0 %496
      %vm498 = vcmask 900096
      %v499 = vsel %vm498, %v493, %v495
      %v500 = vsel %vm498, %v495, %v497
      %504 = vst [vmem:[#allocation4 + $0x48] sm:$0xf] %v499
      %505 = vst [vmem:[#allocation4 + $0x50] sm:$0xf] %v500
      %506 = vst.msk [vmem:[#allocation4 + $0x58] sm:$0xf] %vm442, %v497
      %v507 = vld [vmem:[#allocation2] sm:$0xf]
      %v508 = vld [vmem:[#allocation2 + $0x8] sm:$0xf]
      %v509 = vld [vmem:[#allocation2 + $0x10] sm:$0xf]
      %513 = vrot.lane.b32.xlu0 %v507, 109
      %v514 = vpop.permute.xlu0 %513
      %515 = vrot.lane.b32.xlu0 %v508, 109
      %v516 = vpop.permute.xlu0 %515
      %517 = vrot.lane.b32.xlu0 %v509, 109
      %v518 = vpop.permute.xlu0 %517
      %vm519 = vcmask 891904
      %v520 = vsel %vm519, %v514, %v516
      %v521 = vsel %vm519, %v516, %v518
      %525 = vst [vmem:[#allocation4 + $0x60] sm:$0xf] %v520
      %526 = vst [vmem:[#allocation4 + $0x68] sm:$0xf] %v521
      %527 = vst.msk [vmem:[#allocation4 + $0x70] sm:$0xf] %vm442, %v518
      %v528 = vld [vmem:[#allocation2] sm:$0xf]
      %v529 = vld [vmem:[#allocation2 + $0x8] sm:$0xf]
      %v530 = vld [vmem:[#allocation2 + $0x10] sm:$0xf]
      %534 = vrot.lane.b32.xlu0 %v528, 108
      %v535 = vpop.permute.xlu0 %534
      %536 = vrot.lane.b32.xlu0 %v529, 108
      %v537 = vpop.permute.xlu0 %536
      %538 = vrot.lane.b32.xlu0 %v530, 108
      %v539 = vpop.permute.xlu0 %538
      %vm540 = vcmask 883712
      %v541 = vsel %vm540, %v535, %v537
      %v542 = vsel %vm540, %v537, %v539
      %546 = vst [vmem:[#allocation4 + $0x78] sm:$0xf] %v541
      %547 = vst [vmem:[#allocation4 + $0x80] sm:$0xf] %v542
      %548 = vst.msk [vmem:[#allocation4 + $0x88] sm:$0xf] %vm442, %v539
      %v549 = vld [vmem:[#allocation2] sm:$0xf]
      %v550 = vld [vmem:[#allocation2 + $0x8] sm:$0xf]
      %v551 = vld [vmem:[#allocation2 + $0x10] sm:$0xf]
      %555 = vrot.lane.b32.xlu0 %v549, 92
      %v556 = vpop.permute.xlu0 %555
      %557 = vrot.lane.b32.xlu0 %v550, 92
      %v558 = vpop.permute.xlu0 %557
      %559 = vrot.lane.b32.xlu0 %v551, 92
      %v560 = vpop.permute.xlu0 %559
      %vm561 = vcmask 752640
      %v562 = vsel %vm561, %v556, %v558
      %v563 = vsel %vm561, %v558, %v560
      %567 = vst [vmem:[#allocation4 + $0x90] sm:$0xf] %v562
      %568 = vst [vmem:[#allocation4 + $0x98] sm:$0xf] %v563
      %569 = vst.msk [vmem:[#allocation4 + $0xa0] sm:$0xf] %vm442, %v560
      %v570 = vld [vmem:[#allocation2] sm:$0xf]
      %v571 = vld [vmem:[#allocation2 + $0x8] sm:$0xf]
      %v572 = vld [vmem:[#allocation2 + $0x10] sm:$0xf]
      %576 = vrot.lane.b32.xlu0 %v570, 91
      %v577 = vpop.permute.xlu0 %576
      %578 = vrot.lane.b32.xlu0 %v571, 91
      %v579 = vpop.permute.xlu0 %578
      %580 = vrot.lane.b32.xlu0 %v572, 91
      %v581 = vpop.permute.xlu0 %580
      %vm582 = vcmask 744448
      %v583 = vsel %vm582, %v577, %v579
      %v584 = vsel %vm582, %v579, %v581
      %588 = vst [vmem:[#allocation4 + $0xa8] sm:$0xf] %v583
      %589 = vst [vmem:[#allocation4 + $0xb0] sm:$0xf] %v584
      %590 = vst.msk [vmem:[#allocation4 + $0xb8] sm:$0xf] %vm442, %v581
      %v591 = vld [vmem:[#allocation2] sm:$0xf]
      %v592 = vld [vmem:[#allocation2 + $0x8] sm:$0xf]
      %v593 = vld [vmem:[#allocation2 + $0x10] sm:$0xf]
      %597 = vrot.lane.b32.xlu0 %v591, 90
      %v598 = vpop.permute.xlu0 %597
      %599 = vrot.lane.b32.xlu0 %v592, 90
      %v600 = vpop.permute.xlu0 %599
      %601 = vrot.lane.b32.xlu0 %v593, 90
      %v602 = vpop.permute.xlu0 %601
      %vm603 = vcmask 736256
      %v604 = vsel %vm603, %v598, %v600
      %v605 = vsel %vm603, %v600, %v602
      %609 = vst [vmem:[#allocation4 + $0xc0] sm:$0xf] %v604
      %610 = vst [vmem:[#allocation4 + $0xc8] sm:$0xf] %v605
      %611 = vst.msk [vmem:[#allocation4 + $0xd0] sm:$0xf] %vm442, %v602
      %v612 = vld [vmem:[%s1] sm:$0xff]
      %v613 = vld [vmem:[#allocation4] sm:$0xff]
      %v614 = vld [vmem:[#allocation4 + $0x8] sm:$0xff]
      %v615 = vld [vmem:[#allocation4 + $0x10] sm:$0xff]
      %v616 = vld [vmem:[#allocation4 + $0x18] sm:$0xff]
      %v617 = vld [vmem:[#allocation4 + $0x20] sm:$0xff]
      %v618 = vld [vmem:[#allocation4 + $0x28] sm:$0xff]
      %v619 = vld [vmem:[#allocation4 + $0x30] sm:$0xff]
      %v620 = vld [vmem:[#allocation4 + $0x38] sm:$0xff]
      %v621 = vld [vmem:[#allocation4 + $0x40] sm:$0xff]
      %v622 = vld [vmem:[#allocation4 + $0x48] sm:$0xff]
      %v623 = vld [vmem:[#allocation4 + $0x50] sm:$0xff]
      %v624 = vld [vmem:[#allocation4 + $0x58] sm:$0xff]
      %v625 = vld [vmem:[#allocation4 + $0x60] sm:$0xff]
      %v626 = vld [vmem:[#allocation4 + $0x68] sm:$0xff]
      %v627 = vld [vmem:[#allocation4 + $0x70] sm:$0xff]
      %v628 = vld [vmem:[#allocation4 + $0x78] sm:$0xff]
      %v629 = vld [vmem:[#allocation4 + $0x80] sm:$0xff]
      %v630 = vld [vmem:[#allocation4 + $0x88] sm:$0xff]
      %v631 = vld [vmem:[#allocation4 + $0x90] sm:$0xff]
      %v632 = vld [vmem:[#allocation4 + $0x98] sm:$0xff]
      %v633 = vld [vmem:[#allocation4 + $0xa0] sm:$0xff]
      %v634 = vld [vmem:[#allocation4 + $0xa8] sm:$0xff]
      %v635 = vld [vmem:[#allocation4 + $0xb0] sm:$0xff]
      %v636 = vld [vmem:[#allocation4 + $0xb8] sm:$0xff]
      %v637 = vld [vmem:[#allocation4 + $0xc0] sm:$0xff]
      %v638 = vld [vmem:[#allocation4 + $0xc8] sm:$0xff]
      %v639 = vld [vmem:[#allocation4 + $0xd0] sm:$0xff]
      %vm640 = vcmask 588800
      %v642 = vsel %vm640, %v612, 0
      %644 = vmatprep.subr.mxu0 %v614
      %645 = vmatpush1.msra.mxu0 %v613
      %646 = vmatprep.subr.mxu0 %v617
      %647 = vmatpush1.msra.mxu0 %v616
      %648 = vmatprep.subr.mxu0 %v620
      %649 = vmatpush1.msra.mxu0 %v619
      %650 = vmatprep.subr.mxu0 %v623
      %651 = vmatpush1.msra.mxu0 %v622
      %652 = vmatprep.subr.mxu0 %v626
      %653 = vmatpush1.msra.mxu0 %v625
      %654 = vmatprep.subr.mxu0 %v629
      %655 = vmatpush1.msra.mxu0 %v628
      %656 = vmatprep.subr.mxu0 %v632
      %657 = vmatpush1.msra.mxu0 %v631
      %658 = vmatprep.subr.mxu0 %v635
      %659 = vmatpush1.msra.mxu0 %v634
      %660 = vmatprep.subr.mxu0 %v638
      %661 = vmatpush1.msra.mxu0 %v637
      %662 = vmatprep.subr.mxu0 0.0
      %663 = vmatpush1.msra.mxu0 0.0
      %664 = vmatprep.subr.mxu0 0.0
      %665 = vmatpush1.msra.mxu0 0.0
      %666 = vmatprep.subr.mxu0 0.0
      %667 = vmatpush1.msra.mxu0 0.0
      %668 = vmatprep.subr.mxu0 0.0
      %669 = vmatpush1.msra.mxu0 0.0
      %670 = vmatprep.subr.mxu0 0.0
      %671 = vmatpush1.msra.mxu0 0.0
      %672 = vmatprep.subr.mxu0 0.0
      %673 = vmatpush1.msra.mxu0 0.0
      %674 = vmatprep.subr.mxu0 0.0
      %675 = vmatpush1.msra.mxu0 0.0
      %676 = vmatprep.subr.mxu0 0.0
      %677 = vmatpush1.msra.mxu0 0.0
      %678 = vmatprep.subr.mxu0 0.0
      %679 = vmatpush1.msra.mxu0 0.0
      %680 = vmatprep.subr.mxu0 0.0
      %681 = vmatpush1.msra.mxu0 0.0
      %682 = vmatprep.subr.mxu0 0.0
      %683 = vmatpush1.msra.mxu0 0.0
      %684 = vmatprep.subr.mxu0 0.0
      %685 = vmatpush1.msra.mxu0 0.0
      %686 = vmatprep.subr.mxu0 0.0
      %687 = vmatpush1.msra.mxu0 0.0
      %688 = vmatprep.subr.mxu0 0.0
      %689 = vmatpush1.msra.mxu0 0.0
      %690 = vmatprep.subr.mxu0 0.0
      %691 = vmatpush1.msra.mxu0 0.0
      %692 = vmatprep.subr.mxu0 0.0
      %693 = vmatpush1.msra.mxu0 0.0
      %694 = vmatprep.subr.mxu0 0.0
      %695 = vmatpush1.msra.mxu0 0.0
      %696 = vmatprep.subr.mxu0 0.0
      %697 = vmatpush1.msra.mxu0 0.0
      %698 = vmatprep.subr.mxu0 0.0
      %699 = vmatpush1.msra.mxu0 0.0
      %700 = vmatprep.subr.mxu0 0.0
      %701 = vmatpush1.msra.mxu0 0.0
      %702 = vmatprep.subr.mxu0 0.0
      %703 = vmatpush1.msra.mxu0 0.0
      %704 = vmatprep.subr.mxu0 0.0
      %705 = vmatpush1.msra.mxu0 0.0
      %706 = vmatprep.subr.mxu0 0.0
      %707 = vmatpush1.msra.mxu0 0.0
      %708 = vmatprep.mubr.f32.mxu0 0.0
      %709 = vmatmul.mubr.f32.gmra.mrb[0].mxu0 %v642
      %v710 = vpop.f32.mrb[0].mxu0
      %v711 = vadd.f32 0.0, %v710
      %v712 = vpop.f32.mrb[0].mxu0
      %v713 = vadd.f32 0.0, %v712
      %714 = vdwg.mxu0
      %715 = vmatprep.subr.mxu0 0.0
      %716 = vmatpush1.msra.mxu0 %v615
      %717 = vmatprep.subr.mxu0 0.0
      %718 = vmatpush1.msra.mxu0 %v618
      %719 = vmatprep.subr.mxu0 0.0
      %720 = vmatpush1.msra.mxu0 %v621
      %721 = vmatprep.subr.mxu0 0.0
      %722 = vmatpush1.msra.mxu0 %v624
      %723 = vmatprep.subr.mxu0 0.0
      %724 = vmatpush1.msra.mxu0 %v627
      %725 = vmatprep.subr.mxu0 0.0
      %726 = vmatpush1.msra.mxu0 %v630
      %727 = vmatprep.subr.mxu0 0.0
      %728 = vmatpush1.msra.mxu0 %v633
      %729 = vmatprep.subr.mxu0 0.0
      %730 = vmatpush1.msra.mxu0 %v636
      %731 = vmatprep.subr.mxu0 0.0
      %732 = vmatpush1.msra.mxu0 %v639
      %733 = vmatprep.subr.mxu0 0.0
      %734 = vmatpush1.msra.mxu0 0.0
      %735 = vmatprep.subr.mxu0 0.0
      %736 = vmatpush1.msra.mxu0 0.0
      %737 = vmatprep.subr.mxu0 0.0
      %738 = vmatpush1.msra.mxu0 0.0
      %739 = vmatprep.subr.mxu0 0.0
      %740 = vmatpush1.msra.mxu0 0.0
      %741 = vmatprep.subr.mxu0 0.0
      %742 = vmatpush1.msra.mxu0 0.0
      %743 = vmatprep.subr.mxu0 0.0
      %744 = vmatpush1.msra.mxu0 0.0
      %745 = vmatprep.subr.mxu0 0.0
      %746 = vmatpush1.msra.mxu0 0.0
      %747 = vmatprep.subr.mxu0 0.0
      %748 = vmatpush1.msra.mxu0 0.0
      %749 = vmatprep.subr.mxu0 0.0
      %750 = vmatpush1.msra.mxu0 0.0
      %751 = vmatprep.subr.mxu0 0.0
      %752 = vmatpush1.msra.mxu0 0.0
      %753 = vmatprep.subr.mxu0 0.0
      %754 = vmatpush1.msra.mxu0 0.0
      %755 = vmatprep.subr.mxu0 0.0
      %756 = vmatpush1.msra.mxu0 0.0
      %757 = vmatprep.subr.mxu0 0.0
      %758 = vmatpush1.msra.mxu0 0.0
      %759 = vmatprep.subr.mxu0 0.0
      %760 = vmatpush1.msra.mxu0 0.0
      %761 = vmatprep.subr.mxu0 0.0
      %762 = vmatpush1.msra.mxu0 0.0
      %763 = vmatprep.subr.mxu0 0.0
      %764 = vmatpush1.msra.mxu0 0.0
      %765 = vmatprep.subr.mxu0 0.0
      %766 = vmatpush1.msra.mxu0 0.0
      %767 = vmatprep.subr.mxu0 0.0
      %768 = vmatpush1.msra.mxu0 0.0
      %769 = vmatprep.subr.mxu0 0.0
      %770 = vmatpush1.msra.mxu0 0.0
      %771 = vmatprep.subr.mxu0 0.0
      %772 = vmatpush1.msra.mxu0 0.0
      %773 = vmatprep.subr.mxu0 0.0
      %774 = vmatpush1.msra.mxu0 0.0
      %775 = vmatprep.subr.mxu0 0.0
      %776 = vmatpush1.msra.mxu0 0.0
      %777 = vmatprep.subr.mxu0 0.0
      %778 = vmatpush1.msra.mxu0 0.0
      %779 = vmatprep.mubr.f32.mxu0 0.0
      %780 = vmatmul.mubr.f32.gmra.mrb[0].mxu0 %v642
      %v781 = vpop.f32.mrb[0].mxu0
      %v782 = vadd.f32 0.0, %v781
      %v783 = vpop.f32.mrb[0].mxu0
      %784 = vdwg.mxu0
      %v785 = vld [vmem:[%s3] sm:$0xff]
      %787 = vset.pattern.permute.xlu0 0
      %788 = vperm.xlu0 %787, %v785
      %v789 = vpop.permute.xlu0 %788
      %v791 = vmul.f32 %v711, %v789
      %v792 = vmul.f32 %v713, %v789
      %v793 = vmul.f32 %v782, %v789
      %v794 = vld [vmem:[%s4] sm:$0xff]
      %796 = vset.pattern.permute.xlu0 0
      %797 = vperm.xlu0 %796, %v794
      %v798 = vpop.permute.xlu0 %797
      %v800 = vadd.f32 %v791, %v798
      %v801 = vadd.f32 %v792, %v798
      %v802 = vadd.f32 %v793, %v798
      %v803 = vsel %vm349, 1, 0
      %v804 = vlaneseq
      %v805 = vshrl.u32 %v804, 7
      %v806 = vsub.s32 0, %v805
      %v807 = vrot.slane %v803, %v806
      %v808 = vlaneseq
      %v809 = vshrl.u32 %v808, 7
      %v810 = vsub.s32 1, %v809
      %v811 = vrot.slane %v803, %v810
      %v812 = vlaneseq
      %v813 = vshrl.u32 %v812, 7
      %v814 = vsub.s32 2, %v813
      %v815 = vrot.slane %v803, %v814
      %vm816 = vcmp.eq.s32.totalorder %v807, 1
      %vm817 = vcmp.eq.s32.totalorder %v811, 1
      %vm818 = vcmp.eq.s32.totalorder %v815, 1
      %v819 = vsel %vm816, %v800, -1e+30
      %v820 = vsel %vm817, %v801, -1e+30
      %v821 = vsel %vm818, %v802, -1e+30
      %825 = vrot.lane.b32.xlu0 %v819, 19
      %v826 = vpop.permute.xlu0 %825
      %827 = vrot.lane.b32.xlu0 %v820, 19
      %v828 = vpop.permute.xlu0 %827
      %829 = vrot.lane.b32.xlu0 %v821, 19
      %v830 = vpop.permute.xlu0 %829
      %vm831 = vcmask 154624
      %v832 = vsel %vm831, %v826, %v828
      %v833 = vsel %vm831, %v828, %v830
      %vm837 = vcmask 1047704
      %838 = vst.msk [vmem:[#allocation2] sm:$0xff] %vm837, %v826
      %839 = vst [vmem:[#allocation2 + $0x8] sm:$0xff] %v832
      %vm840 = vcmask 711680
      %841 = vst.msk [vmem:[#allocation2 + $0x10] sm:$0xff] %vm840, %v833
      %v842 = vld [vmem:[#allocation2] sm:$0xff]
      %v843 = vld [vmem:[#allocation2 + $0x8] sm:$0xff]
      %v844 = vld [vmem:[#allocation2 + $0x10] sm:$0xff]
      %848 = vrot.lane.b32.xlu0 %v842, 127
      %v849 = vpop.permute.xlu0 %848
      %850 = vrot.lane.b32.xlu0 %v843, 127
      %v851 = vpop.permute.xlu0 %850
      %852 = vrot.lane.b32.xlu0 %v844, 127
      %v853 = vpop.permute.xlu0 %852
      %v854 = vsel %vm456, %v849, %v851
      %v855 = vsel %vm456, %v851, %v853
      %v859 = vmax.f32 %v842, %v854
      %v860 = vmax.f32 %v843, %v855
      %v861 = vmax.f32 %v844, %v853
      %862 = vrot.lane.b32.xlu0 %v842, 126
      %v863 = vpop.permute.xlu0 %862
      %864 = vrot.lane.b32.xlu0 %v843, 126
      %v865 = vpop.permute.xlu0 %864
      %866 = vrot.lane.b32.xlu0 %v844, 126
      %v867 = vpop.permute.xlu0 %866
      %v868 = vsel %vm477, %v863, %v865
      %v869 = vsel %vm477, %v865, %v867
      %v873 = vmax.f32 %v859, %v868
      %v874 = vmax.f32 %v860, %v869
      %v875 = vmax.f32 %v861, %v867
      %876 = vrot.lane.b32.xlu0 %v842, 110
      %v877 = vpop.permute.xlu0 %876
      %878 = vrot.lane.b32.xlu0 %v843, 110
      %v879 = vpop.permute.xlu0 %878
      %880 = vrot.lane.b32.xlu0 %v844, 110
      %v881 = vpop.permute.xlu0 %880
      %v882 = vsel %vm498, %v877, %v879
      %v883 = vsel %vm498, %v879, %v881
      %v887 = vmax.f32 %v873, %v882
      %v888 = vmax.f32 %v874, %v883
      %v889 = vmax.f32 %v875, %v881
      %890 = vrot.lane.b32.xlu0 %v842, 109
      %v891 = vpop.permute.xlu0 %890
      %892 = vrot.lane.b32.xlu0 %v843, 109
      %v893 = vpop.permute.xlu0 %892
      %894 = vrot.lane.b32.xlu0 %v844, 109
      %v895 = vpop.permute.xlu0 %894
      %v896 = vsel %vm519, %v891, %v893
      %v897 = vsel %vm519, %v893, %v895
      %v901 = vmax.f32 %v887, %v896
      %v902 = vmax.f32 %v888, %v897
      %v903 = vmax.f32 %v889, %v895
      %904 = vrot.lane.b32.xlu0 %v842, 108
      %v905 = vpop.permute.xlu0 %904
      %906 = vrot.lane.b32.xlu0 %v843, 108
      %v907 = vpop.permute.xlu0 %906
      %908 = vrot.lane.b32.xlu0 %v844, 108
      %v909 = vpop.permute.xlu0 %908
      %v910 = vsel %vm540, %v905, %v907
      %v911 = vsel %vm540, %v907, %v909
      %v915 = vmax.f32 %v901, %v910
      %v916 = vmax.f32 %v902, %v911
      %v917 = vmax.f32 %v903, %v909
      %918 = vrot.lane.b32.xlu0 %v842, 92
      %v919 = vpop.permute.xlu0 %918
      %920 = vrot.lane.b32.xlu0 %v843, 92
      %v921 = vpop.permute.xlu0 %920
      %922 = vrot.lane.b32.xlu0 %v844, 92
      %v923 = vpop.permute.xlu0 %922
      %v924 = vsel %vm561, %v919, %v921
      %v925 = vsel %vm561, %v921, %v923
      %v929 = vmax.f32 %v915, %v924
      %v930 = vmax.f32 %v916, %v925
      %v931 = vmax.f32 %v917, %v923
      %932 = vrot.lane.b32.xlu0 %v842, 91
      %v933 = vpop.permute.xlu0 %932
      %934 = vrot.lane.b32.xlu0 %v843, 91
      %v935 = vpop.permute.xlu0 %934
      %936 = vrot.lane.b32.xlu0 %v844, 91
      %v937 = vpop.permute.xlu0 %936
      %v938 = vsel %vm582, %v933, %v935
      %v939 = vsel %vm582, %v935, %v937
      %v943 = vmax.f32 %v929, %v938
      %v944 = vmax.f32 %v930, %v939
      %v945 = vmax.f32 %v931, %v937
      %946 = vrot.lane.b32.xlu0 %v842, 90
      %v947 = vpop.permute.xlu0 %946
      %948 = vrot.lane.b32.xlu0 %v843, 90
      %v949 = vpop.permute.xlu0 %948
      %950 = vrot.lane.b32.xlu0 %v844, 90
      %v951 = vpop.permute.xlu0 %950
      %v952 = vsel %vm603, %v947, %v949
      %v953 = vsel %vm603, %v949, %v951
      %v957 = vmax.f32 %v943, %v952
      %v958 = vmax.f32 %v944, %v953
      %v959 = vmax.f32 %v945, %v951
      %v960 = vld [vmem:[%s7] sm:$0xff]
      %v961 = vld [vmem:[%s7 + $0x8] sm:$0xff]
      %v962 = vld [vmem:[%s7 + $0x10] sm:$0xff]
      %v963 = vld [vmem:[%s7 + $0x18] sm:$0xff]
      %v964 = vld [vmem:[%s7 + $0x20] sm:$0xff]
      %v965 = vld [vmem:[%s7 + $0x28] sm:$0xff]
      %v966 = vld [vmem:[%s7 + $0x30] sm:$0xff]
      %v967 = vld [vmem:[%s7 + $0x38] sm:$0xff]
      %v968 = vld [vmem:[%s7 + $0x40] sm:$0xff]
      %v969 = vld [vmem:[%s7 + $0x48] sm:$0xff]
      %v970 = vld [vmem:[%s7 + $0x50] sm:$0xff]
      %v971 = vld [vmem:[%s7 + $0x58] sm:$0xff]
      %v972 = vld [vmem:[%s7 + $0x60] sm:$0xff]
      %v973 = vld [vmem:[%s7 + $0x68] sm:$0xff]
      %v974 = vld [vmem:[%s7 + $0x70] sm:$0xff]
      %v975 = vld [vmem:[%s7 + $0x78] sm:$0xff]
      %v976 = vld [vmem:[%s7 + $0x80] sm:$0xff]
      %v977 = vld [vmem:[%s7 + $0x88] sm:$0xff]
      %v978 = vld [vmem:[%s7 + $0x90] sm:$0xff]
      %v979 = vld [vmem:[%s7 + $0x98] sm:$0xff]
      %v980 = vld [vmem:[%s7 + $0xa0] sm:$0xff]
      %v981 = vld [vmem:[%s7 + $0xa8] sm:$0xff]
      %v982 = vld [vmem:[%s7 + $0xb0] sm:$0xff]
      %v983 = vld [vmem:[%s7 + $0xb8] sm:$0xff]
      %v984 = vld [vmem:[%s7 + $0xc0] sm:$0xff]
      %v985 = vld [vmem:[%s7 + $0xc8] sm:$0xff]
      %v986 = vld [vmem:[%s7 + $0xd0] sm:$0xff]
      %v987 = vld [vmem:[%s7 + $0xd8] sm:$0xff]
      %v988 = vld [vmem:[%s7 + $0xe0] sm:$0xff]
      %v989 = vld [vmem:[%s7 + $0xe8] sm:$0xff]
      %v990 = vld [vmem:[%s7 + $0xf0] sm:$0xff]
      %v991 = vld [vmem:[%s7 + $0xf8] sm:$0xff]
      %v992 = vld [vmem:[%s7 + $0x100] sm:$0xff]
      %v993 = vld [vmem:[%s7 + $0x108] sm:$0xff]
      %v994 = vld [vmem:[%s7 + $0x110] sm:$0xff]
      %v995 = vld [vmem:[%s7 + $0x118] sm:$0xff]
      %v996 = vld [vmem:[%s7 + $0x120] sm:$0xff]
      %v997 = vld [vmem:[%s7 + $0x128] sm:$0xff]
      %v998 = vld [vmem:[%s7 + $0x130] sm:$0xff]
      %v999 = vld [vmem:[%s7 + $0x138] sm:$0xff]
      %v1000 = vld [vmem:[%s7 + $0x140] sm:$0xf]
      %v1002 = vsel %vm312, %v959, 0
      %vm1004 = vcmask 1043456
      %v1006 = vsel %vm1004, %v1000, 0
      %1008 = vmatprep.subr.mxu0 0.0
      %1009 = vmatpush1.msra.mxu0 %v960
      %1010 = vmatprep.subr.mxu0 0.0
      %1011 = vmatpush1.msra.mxu0 %v961
      %1012 = vmatprep.subr.mxu0 0.0
      %1013 = vmatpush1.msra.mxu0 %v962
      %1014 = vmatprep.subr.mxu0 0.0
      %1015 = vmatpush1.msra.mxu0 %v963
      %1016 = vmatprep.subr.mxu0 0.0
      %1017 = vmatpush1.msra.mxu0 %v964
      %1018 = vmatprep.subr.mxu0 0.0
      %1019 = vmatpush1.msra.mxu0 %v965
      %1020 = vmatprep.subr.mxu0 0.0
      %1021 = vmatpush1.msra.mxu0 %v966
      %1022 = vmatprep.subr.mxu0 0.0
      %1023 = vmatpush1.msra.mxu0 %v967
      %1024 = vmatprep.subr.mxu0 0.0
      %1025 = vmatpush1.msra.mxu0 %v968
      %1026 = vmatprep.subr.mxu0 0.0
      %1027 = vmatpush1.msra.mxu0 %v969
      %1028 = vmatprep.subr.mxu0 0.0
      %1029 = vmatpush1.msra.mxu0 %v970
      %1030 = vmatprep.subr.mxu0 0.0
      %1031 = vmatpush1.msra.mxu0 %v971
      %1032 = vmatprep.subr.mxu0 0.0
      %1033 = vmatpush1.msra.mxu0 %v972
      %1034 = vmatprep.subr.mxu0 0.0
      %1035 = vmatpush1.msra.mxu0 %v973
      %1036 = vmatprep.subr.mxu0 0.0
      %1037 = vmatpush1.msra.mxu0 %v974
      %1038 = vmatprep.subr.mxu0 0.0
      %1039 = vmatpush1.msra.mxu0 %v975
      %1040 = vmatprep.subr.mxu0 0.0
      %1041 = vmatpush1.msra.mxu0 %v976
      %1042 = vmatprep.subr.mxu0 0.0
      %1043 = vmatpush1.msra.mxu0 %v977
      %1044 = vmatprep.subr.mxu0 0.0
      %1045 = vmatpush1.msra.mxu0 %v978
      %1046 = vmatprep.subr.mxu0 0.0
      %1047 = vmatpush1.msra.mxu0 %v979
      %1048 = vmatprep.subr.mxu0 0.0
      %1049 = vmatpush1.msra.mxu0 %v980
      %1050 = vmatprep.subr.mxu0 0.0
      %1051 = vmatpush1.msra.mxu0 %v981
      %1052 = vmatprep.subr.mxu0 0.0
      %1053 = vmatpush1.msra.mxu0 %v982
      %1054 = vmatprep.subr.mxu0 0.0
      %1055 = vmatpush1.msra.mxu0 %v983
      %1056 = vmatprep.subr.mxu0 0.0
      %1057 = vmatpush1.msra.mxu0 %v984
      %1058 = vmatprep.subr.mxu0 0.0
      %1059 = vmatpush1.msra.mxu0 %v985
      %1060 = vmatprep.subr.mxu0 0.0
      %1061 = vmatpush1.msra.mxu0 %v986
      %1062 = vmatprep.subr.mxu0 0.0
      %1063 = vmatpush1.msra.mxu0 %v987
      %1064 = vmatprep.subr.mxu0 0.0
      %1065 = vmatpush1.msra.mxu0 %v988
      %1066 = vmatprep.subr.mxu0 0.0
      %1067 = vmatpush1.msra.mxu0 %v989
      %1068 = vmatprep.subr.mxu0 0.0
      %1069 = vmatpush1.msra.mxu0 %v990
      %1070 = vmatprep.subr.mxu0 0.0
      %1071 = vmatpush1.msra.mxu0 %v991
      %1072 = vmatprep.mubr.f32.mxu0 %v958
      %1073 = vmatmul.mubr.f32.gmra.mrb[0].mxu0 %v957
      %v1074 = vpop.f32.mrb[0].mxu0
      %v1075 = vadd.f32 0.0, %v1074
      %v1076 = vpop.f32.mrb[0].mxu0
      %1077 = vdwg.mxu0
      %1078 = vmatprep.subr.mxu0 0.0
      %1079 = vmatpush1.msra.mxu0 %v992
      %1080 = vmatprep.subr.mxu0 0.0
      %1081 = vmatpush1.msra.mxu0 %v993
      %1082 = vmatprep.subr.mxu0 0.0
      %1083 = vmatpush1.msra.mxu0 %v994
      %1084 = vmatprep.subr.mxu0 0.0
      %1085 = vmatpush1.msra.mxu0 %v995
      %1086 = vmatprep.subr.mxu0 0.0
      %1087 = vmatpush1.msra.mxu0 %v996
      %1088 = vmatprep.subr.mxu0 0.0
      %1089 = vmatpush1.msra.mxu0 %v997
      %1090 = vmatprep.subr.mxu0 0.0
      %1091 = vmatpush1.msra.mxu0 %v998
      %1092 = vmatprep.subr.mxu0 0.0
      %1093 = vmatpush1.msra.mxu0 %v999
      %1094 = vmatprep.subr.mxu0 0.0
      %1095 = vmatpush1.msra.mxu0 %v1006
      %1096 = vmatprep.subr.mxu0 0.0
      %1097 = vmatpush1.msra.mxu0 0.0
      %1098 = vmatprep.subr.mxu0 0.0
      %1099 = vmatpush1.msra.mxu0 0.0
      %1100 = vmatprep.subr.mxu0 0.0
      %1101 = vmatpush1.msra.mxu0 0.0
      %1102 = vmatprep.subr.mxu0 0.0
      %1103 = vmatpush1.msra.mxu0 0.0
      %1104 = vmatprep.subr.mxu0 0.0
      %1105 = vmatpush1.msra.mxu0 0.0
      %1106 = vmatprep.subr.mxu0 0.0
      %1107 = vmatpush1.msra.mxu0 0.0
      %1108 = vmatprep.subr.mxu0 0.0
      %1109 = vmatpush1.msra.mxu0 0.0
      %1110 = vmatprep.subr.mxu0 0.0
      %1111 = vmatpush1.msra.mxu0 0.0
      %1112 = vmatprep.subr.mxu0 0.0
      %1113 = vmatpush1.msra.mxu0 0.0
      %1114 = vmatprep.subr.mxu0 0.0
      %1115 = vmatpush1.msra.mxu0 0.0
      %1116 = vmatprep.subr.mxu0 0.0
      %1117 = vmatpush1.msra.mxu0 0.0
      %1118 = vmatprep.subr.mxu0 0.0
      %1119 = vmatpush1.msra.mxu0 0.0
      %1120 = vmatprep.subr.mxu0 0.0
      %1121 = vmatpush1.msra.mxu0 0.0
      %1122 = vmatprep.subr.mxu0 0.0
      %1123 = vmatpush1.msra.mxu0 0.0
      %1124 = vmatprep.subr.mxu0 0.0
      %1125 = vmatpush1.msra.mxu0 0.0
      %1126 = vmatprep.subr.mxu0 0.0
      %1127 = vmatpush1.msra.mxu0 0.0
      %1128 = vmatprep.subr.mxu0 0.0
      %1129 = vmatpush1.msra.mxu0 0.0
      %1130 = vmatprep.subr.mxu0 0.0
      %1131 = vmatpush1.msra.mxu0 0.0
      %1132 = vmatprep.subr.mxu0 0.0
      %1133 = vmatpush1.msra.mxu0 0.0
      %1134 = vmatprep.subr.mxu0 0.0
      %1135 = vmatpush1.msra.mxu0 0.0
      %1136 = vmatprep.subr.mxu0 0.0
      %1137 = vmatpush1.msra.mxu0 0.0
      %1138 = vmatprep.subr.mxu0 0.0
      %1139 = vmatpush1.msra.mxu0 0.0
      %1140 = vmatprep.subr.mxu0 0.0
      %1141 = vmatpush1.msra.mxu0 0.0
      %1142 = vmatprep.mubr.f32.mxu0 0.0
      %1143 = vmatmul.mubr.f32.gmra.mrb[0].mxu0 %v1002
      %v1144 = vpop.f32.mrb[0].mxu0
      %v1145 = vadd.f32 %v1075, %v1144
      %v1146 = vpop.f32.mrb[0].mxu0
      %1147 = vdwg.mxu0
      %v1148 = vld [vmem:[%s2] sm:$0xff]
      %s1149 = scalar_lea.vmem %s3, 8
      %v1150 = vld [vmem:[%s1149] sm:$0xff]
      %s1151 = scalar_lea.vmem %s4, 8
      %v1152 = vld [vmem:[%s1151] sm:$0xff]
      %v1153 = vmax.f32 %v1145, 0.0
      %1155 = vrot.lane.b32.xlu0 %v1153, 11
      %v1156 = vpop.permute.xlu0 %1155
      %vm1158 = vcmask 908376
      %1159 = vst.msk [vmem:[#allocation3] sm:$0xff] %vm1158, %v1156
      %v1160 = vld [vmem:[#allocation3] sm:$0xff]
      %1161 = vst.msk [vmem:[#allocation5] sm:$0xff] %vm338, %v1160
      %v1162 = vld [vmem:[#allocation3] sm:$0xff]
      %1164 = vrot.lane.b32.xlu0 %v1162, 127
      %v1165 = vpop.permute.xlu0 %1164
      %1167 = vst.msk [vmem:[#allocation5 + $0x8] sm:$0xff] %vm338, %v1165
      %v1168 = vld [vmem:[#allocation3] sm:$0xff]
      %1170 = vrot.lane.b32.xlu0 %v1168, 126
      %v1171 = vpop.permute.xlu0 %1170
      %1173 = vst.msk [vmem:[#allocation5 + $0x10] sm:$0xff] %vm338, %v1171
      %v1174 = vld [vmem:[#allocation3] sm:$0xff]
      %1176 = vrot.lane.b32.xlu0 %v1174, 118
      %v1177 = vpop.permute.xlu0 %1176
      %1179 = vst.msk [vmem:[#allocation5 + $0x18] sm:$0xff] %vm338, %v1177
      %v1180 = vld [vmem:[#allocation3] sm:$0xff]
      %1182 = vrot.lane.b32.xlu0 %v1180, 117
      %v1183 = vpop.permute.xlu0 %1182
      %1185 = vst.msk [vmem:[#allocation5 + $0x20] sm:$0xff] %vm338, %v1183
      %v1186 = vld [vmem:[#allocation3] sm:$0xff]
      %1188 = vrot.lane.b32.xlu0 %v1186, 116
      %v1189 = vpop.permute.xlu0 %1188
      %1191 = vst.msk [vmem:[#allocation5 + $0x28] sm:$0xff] %vm338, %v1189
      %v1192 = vld [vmem:[#allocation3] sm:$0xff]
      %1194 = vrot.lane.b32.xlu0 %v1192, 108
      %v1195 = vpop.permute.xlu0 %1194
      %1197 = vst.msk [vmem:[#allocation5 + $0x30] sm:$0xff] %vm338, %v1195
      %v1198 = vld [vmem:[#allocation3] sm:$0xff]
      %1200 = vrot.lane.b32.xlu0 %v1198, 107
      %v1201 = vpop.permute.xlu0 %1200
      %1203 = vst.msk [vmem:[#allocation5 + $0x38] sm:$0xff] %vm338, %v1201
      %v1204 = vld [vmem:[#allocation3] sm:$0xff]
      %1206 = vrot.lane.b32.xlu0 %v1204, 106
      %v1207 = vpop.permute.xlu0 %1206
      %1209 = vst.msk [vmem:[#allocation5 + $0x40] sm:$0xff] %vm338, %v1207
      %v1210 = vld [vmem:[#allocation5] sm:$0xff]
      %v1211 = vld [vmem:[#allocation5 + $0x8] sm:$0xff]
      %v1212 = vld [vmem:[#allocation5 + $0x10] sm:$0xff]
      %v1213 = vld [vmem:[#allocation5 + $0x18] sm:$0xff]
      %v1214 = vld [vmem:[#allocation5 + $0x20] sm:$0xff]
      %v1215 = vld [vmem:[#allocation5 + $0x28] sm:$0xff]
      %v1216 = vld [vmem:[#allocation5 + $0x30] sm:$0xff]
      %v1217 = vld [vmem:[#allocation5 + $0x38] sm:$0xff]
      %v1218 = vld [vmem:[#allocation5 + $0x40] sm:$0xff]
      %v1220 = vsel %vm640, %v1148, 0
      %1222 = vmatprep.subr.mxu0 0.0
      %1223 = vmatpush1.msra.mxu0 %v1210
      %1224 = vmatprep.subr.mxu0 0.0
      %1225 = vmatpush1.msra.mxu0 %v1211
      %1226 = vmatprep.subr.mxu0 0.0
      %1227 = vmatpush1.msra.mxu0 %v1212
      %1228 = vmatprep.subr.mxu0 0.0
      %1229 = vmatpush1.msra.mxu0 %v1213
      %1230 = vmatprep.subr.mxu0 0.0
      %1231 = vmatpush1.msra.mxu0 %v1214
      %1232 = vmatprep.subr.mxu0 0.0
      %1233 = vmatpush1.msra.mxu0 %v1215
      %1234 = vmatprep.subr.mxu0 0.0
      %1235 = vmatpush1.msra.mxu0 %v1216
      %1236 = vmatprep.subr.mxu0 0.0
      %1237 = vmatpush1.msra.mxu0 %v1217
      %1238 = vmatprep.subr.mxu0 0.0
      %1239 = vmatpush1.msra.mxu0 %v1218
      %1240 = vmatprep.subr.mxu0 0.0
      %1241 = vmatpush1.msra.mxu0 0.0
      %1242 = vmatprep.subr.mxu0 0.0
      %1243 = vmatpush1.msra.mxu0 0.0
      %1244 = vmatprep.subr.mxu0 0.0
      %1245 = vmatpush1.msra.mxu0 0.0
      %1246 = vmatprep.subr.mxu0 0.0
      %1247 = vmatpush1.msra.mxu0 0.0
      %1248 = vmatprep.subr.mxu0 0.0
      %1249 = vmatpush1.msra.mxu0 0.0
      %1250 = vmatprep.subr.mxu0 0.0
      %1251 = vmatpush1.msra.mxu0 0.0
      %1252 = vmatprep.subr.mxu0 0.0
      %1253 = vmatpush1.msra.mxu0 0.0
      %1254 = vmatprep.subr.mxu0 0.0
      %1255 = vmatpush1.msra.mxu0 0.0
      %1256 = vmatprep.subr.mxu0 0.0
      %1257 = vmatpush1.msra.mxu0 0.0
      %1258 = vmatprep.subr.mxu0 0.0
      %1259 = vmatpush1.msra.mxu0 0.0
      %1260 = vmatprep.subr.mxu0 0.0
      %1261 = vmatpush1.msra.mxu0 0.0
      %1262 = vmatprep.subr.mxu0 0.0
      %1263 = vmatpush1.msra.mxu0 0.0
      %1264 = vmatprep.subr.mxu0 0.0
      %1265 = vmatpush1.msra.mxu0 0.0
      %1266 = vmatprep.subr.mxu0 0.0
      %1267 = vmatpush1.msra.mxu0 0.0
      %1268 = vmatprep.subr.mxu0 0.0
      %1269 = vmatpush1.msra.mxu0 0.0
      %1270 = vmatprep.subr.mxu0 0.0
      %1271 = vmatpush1.msra.mxu0 0.0
      %1272 = vmatprep.subr.mxu0 0.0
      %1273 = vmatpush1.msra.mxu0 0.0
      %1274 = vmatprep.subr.mxu0 0.0
      %1275 = vmatpush1.msra.mxu0 0.0
      %1276 = vmatprep.subr.mxu0 0.0
      %1277 = vmatpush1.msra.mxu0 0.0
      %1278 = vmatprep.subr.mxu0 0.0
      %1279 = vmatpush1.msra.mxu0 0.0
      %1280 = vmatprep.subr.mxu0 0.0
      %1281 = vmatpush1.msra.mxu0 0.0
      %1282 = vmatprep.subr.mxu0 0.0
      %1283 = vmatpush1.msra.mxu0 0.0
      %1284 = vmatprep.subr.mxu0 0.0
      %1285 = vmatpush1.msra.mxu0 0.0
      %1286 = vmatprep.mubr.f32.mxu0 0.0
      %1287 = vmatmul.mubr.f32.gmra.mrb[0].mxu0 %v1220
      %v1288 = vpop.f32.mrb[0].mxu0
      %v1289 = vadd.f32 0.0, %v1288
      %v1290 = vpop.f32.mrb[0].mxu0
      %1291 = vdwg.mxu0
      %1293 = vset.pattern.permute.xlu0 0
      %1294 = vperm.xlu0 %1293, %v1150
      %v1295 = vpop.permute.xlu0 %1294
      %v1297 = vmul.f32 %v1289, %v1295
      %1299 = vset.pattern.permute.xlu0 0
      %1300 = vperm.xlu0 %1299, %v1152
      %v1301 = vpop.permute.xlu0 %1300
      %v1303 = vadd.f32 %v1297, %v1301
      %v1304 = vsel %vm351, 1, 0
      %v1305 = vlaneseq
      %v1306 = vshrl.u32 %v1305, 7
      %v1307 = vsub.s32 0, %v1306
      %v1308 = vrot.slane %v1304, %v1307
      %vm1309 = vcmp.eq.s32.totalorder %v1308, 1
      %v1310 = vsel %vm1309, %v1303, 0.0
      %s1311 = scalar_lea.vmem %s2, 8
      %v1312 = vld [vmem:[%s1311] sm:$0xff]
      %s1313 = scalar_lea.vmem %s3, 16
      %v1314 = vld [vmem:[%s1313] sm:$0xff]
      %s1315 = scalar_lea.vmem %s4, 16
      %v1316 = vld [vmem:[%s1315] sm:$0xff]
      %v1317 = vmax.f32 %v1310, 0.0
      %1319 = vrot.lane.b32.xlu0 %v1317, 11
      %v1320 = vpop.permute.xlu0 %1319
      %1322 = vst.msk [vmem:[#allocation3] sm:$0xff] %vm1158, %v1320
      %v1323 = vld [vmem:[#allocation3] sm:$0xff]
      %1324 = vst.msk [vmem:[#allocation5] sm:$0xff] %vm338, %v1323
      %v1325 = vld [vmem:[#allocation3] sm:$0xff]
      %1327 = vrot.lane.b32.xlu0 %v1325, 127
      %v1328 = vpop.permute.xlu0 %1327
      %1330 = vst.msk [vmem:[#allocation5 + $0x8] sm:$0xff] %vm338, %v1328
      %v1331 = vld [vmem:[#allocation3] sm:$0xff]
      %1333 = vrot.lane.b32.xlu0 %v1331, 126
      %v1334 = vpop.permute.xlu0 %1333
      %1336 = vst.msk [vmem:[#allocation5 + $0x10] sm:$0xff] %vm338, %v1334
      %v1337 = vld [vmem:[#allocation3] sm:$0xff]
      %1339 = vrot.lane.b32.xlu0 %v1337, 118
      %v1340 = vpop.permute.xlu0 %1339
      %1342 = vst.msk [vmem:[#allocation5 + $0x18] sm:$0xff] %vm338, %v1340
      %v1343 = vld [vmem:[#allocation3] sm:$0xff]
      %1345 = vrot.lane.b32.xlu0 %v1343, 117
      %v1346 = vpop.permute.xlu0 %1345
      %1348 = vst.msk [vmem:[#allocation5 + $0x20] sm:$0xff] %vm338, %v1346
      %v1349 = vld [vmem:[#allocation3] sm:$0xff]
      %1351 = vrot.lane.b32.xlu0 %v1349, 116
      %v1352 = vpop.permute.xlu0 %1351
      %1354 = vst.msk [vmem:[#allocation5 + $0x28] sm:$0xff] %vm338, %v1352
      %v1355 = vld [vmem:[#allocation3] sm:$0xff]
      %1357 = vrot.lane.b32.xlu0 %v1355, 108
      %v1358 = vpop.permute.xlu0 %1357
      %1360 = vst.msk [vmem:[#allocation5 + $0x30] sm:$0xff] %vm338, %v1358
      %v1361 = vld [vmem:[#allocation3] sm:$0xff]
      %1363 = vrot.lane.b32.xlu0 %v1361, 107
      %v1364 = vpop.permute.xlu0 %1363
      %1366 = vst.msk [vmem:[#allocation5 + $0x38] sm:$0xff] %vm338, %v1364
      %v1367 = vld [vmem:[#allocation3] sm:$0xff]
      %1369 = vrot.lane.b32.xlu0 %v1367, 106
      %v1370 = vpop.permute.xlu0 %1369
      %1372 = vst.msk [vmem:[#allocation5 + $0x40] sm:$0xff] %vm338, %v1370
      %v1373 = vld [vmem:[#allocation5] sm:$0xff]
      %v1374 = vld [vmem:[#allocation5 + $0x8] sm:$0xff]
      %v1375 = vld [vmem:[#allocation5 + $0x10] sm:$0xff]
      %v1376 = vld [vmem:[#allocation5 + $0x18] sm:$0xff]
      %v1377 = vld [vmem:[#allocation5 + $0x20] sm:$0xff]
      %v1378 = vld [vmem:[#allocation5 + $0x28] sm:$0xff]
      %v1379 = vld [vmem:[#allocation5 + $0x30] sm:$0xff]
      %v1380 = vld [vmem:[#allocation5 + $0x38] sm:$0xff]
      %v1381 = vld [vmem:[#allocation5 + $0x40] sm:$0xff]
      %v1383 = vsel %vm640, %v1312, 0
      %1385 = vmatprep.subr.mxu0 0.0
      %1386 = vmatpush1.msra.mxu0 %v1373
      %1387 = vmatprep.subr.mxu0 0.0
      %1388 = vmatpush1.msra.mxu0 %v1374
      %1389 = vmatprep.subr.mxu0 0.0
      %1390 = vmatpush1.msra.mxu0 %v1375
      %1391 = vmatprep.subr.mxu0 0.0
      %1392 = vmatpush1.msra.mxu0 %v1376
      %1393 = vmatprep.subr.mxu0 0.0
      %1394 = vmatpush1.msra.mxu0 %v1377
      %1395 = vmatprep.subr.mxu0 0.0
      %1396 = vmatpush1.msra.mxu0 %v1378
      %1397 = vmatprep.subr.mxu0 0.0
      %1398 = vmatpush1.msra.mxu0 %v1379
      %1399 = vmatprep.subr.mxu0 0.0
      %1400 = vmatpush1.msra.mxu0 %v1380
      %1401 = vmatprep.subr.mxu0 0.0
      %1402 = vmatpush1.msra.mxu0 %v1381
      %1403 = vmatprep.subr.mxu0 0.0
      %1404 = vmatpush1.msra.mxu0 0.0
      %1405 = vmatprep.subr.mxu0 0.0
      %1406 = vmatpush1.msra.mxu0 0.0
      %1407 = vmatprep.subr.mxu0 0.0
      %1408 = vmatpush1.msra.mxu0 0.0
      %1409 = vmatprep.subr.mxu0 0.0
      %1410 = vmatpush1.msra.mxu0 0.0
      %1411 = vmatprep.subr.mxu0 0.0
      %1412 = vmatpush1.msra.mxu0 0.0
      %1413 = vmatprep.subr.mxu0 0.0
      %1414 = vmatpush1.msra.mxu0 0.0
      %1415 = vmatprep.subr.mxu0 0.0
      %1416 = vmatpush1.msra.mxu0 0.0
      %1417 = vmatprep.subr.mxu0 0.0
      %1418 = vmatpush1.msra.mxu0 0.0
      %1419 = vmatprep.subr.mxu0 0.0
      %1420 = vmatpush1.msra.mxu0 0.0
      %1421 = vmatprep.subr.mxu0 0.0
      %1422 = vmatpush1.msra.mxu0 0.0
      %1423 = vmatprep.subr.mxu0 0.0
      %1424 = vmatpush1.msra.mxu0 0.0
      %1425 = vmatprep.subr.mxu0 0.0
      %1426 = vmatpush1.msra.mxu0 0.0
      %1427 = vmatprep.subr.mxu0 0.0
      %1428 = vmatpush1.msra.mxu0 0.0
      %1429 = vmatprep.subr.mxu0 0.0
      %1430 = vmatpush1.msra.mxu0 0.0
      %1431 = vmatprep.subr.mxu0 0.0
      %1432 = vmatpush1.msra.mxu0 0.0
      %1433 = vmatprep.subr.mxu0 0.0
      %1434 = vmatpush1.msra.mxu0 0.0
      %1435 = vmatprep.subr.mxu0 0.0
      %1436 = vmatpush1.msra.mxu0 0.0
      %1437 = vmatprep.subr.mxu0 0.0
      %1438 = vmatpush1.msra.mxu0 0.0
      %1439 = vmatprep.subr.mxu0 0.0
      %1440 = vmatpush1.msra.mxu0 0.0
      %1441 = vmatprep.subr.mxu0 0.0
      %1442 = vmatpush1.msra.mxu0 0.0
      %1443 = vmatprep.subr.mxu0 0.0
      %1444 = vmatpush1.msra.mxu0 0.0
      %1445 = vmatprep.subr.mxu0 0.0
      %1446 = vmatpush1.msra.mxu0 0.0
      %1447 = vmatprep.subr.mxu0 0.0
      %1448 = vmatpush1.msra.mxu0 0.0
      %1449 = vmatprep.mubr.f32.mxu0 0.0
      %1450 = vmatmul.mubr.f32.gmra.mrb[0].mxu0 %v1383
      %v1451 = vpop.f32.mrb[0].mxu0
      %v1452 = vadd.f32 0.0, %v1451
      %v1453 = vpop.f32.mrb[0].mxu0
      %1454 = vdwg.mxu0
      %1456 = vset.pattern.permute.xlu0 0
      %1457 = vperm.xlu0 %1456, %v1314
      %v1458 = vpop.permute.xlu0 %1457
      %v1460 = vmul.f32 %v1452, %v1458
      %1462 = vset.pattern.permute.xlu0 0
      %1463 = vperm.xlu0 %1462, %v1316
      %v1464 = vpop.permute.xlu0 %1463
      %v1466 = vadd.f32 %v1460, %v1464
      %v1467 = vsel %vm1309, %v1466, 0.0
      %v1468 = vadd.f32 %v1467, %v1145
      %s1469 = scalar_lea.vmem %s2, 16
      %v1470 = vld [vmem:[%s1469] sm:$0xff]
      %s1471 = scalar_lea.vmem %s3, 24
      %v1472 = vld [vmem:[%s1471] sm:$0xff]
      %s1473 = scalar_lea.vmem %s4, 24
      %v1474 = vld [vmem:[%s1473] sm:$0xff]
      %v1475 = vmax.f32 %v1468, 0.0
      %1477 = vrot.lane.b32.xlu0 %v1475, 11
      %v1478 = vpop.permute.xlu0 %1477
      %1480 = vst.msk [vmem:[#allocation3] sm:$0xff] %vm1158, %v1478
      %v1481 = vld [vmem:[#allocation3] sm:$0xff]
      %1482 = vst.msk [vmem:[#allocation5] sm:$0xff] %vm338, %v1481
      %v1483 = vld [vmem:[#allocation3] sm:$0xff]
      %1485 = vrot.lane.b32.xlu0 %v1483, 127
      %v1486 = vpop.permute.xlu0 %1485
      %1488 = vst.msk [vmem:[#allocation5 + $0x8] sm:$0xff] %vm338, %v1486
      %v1489 = vld [vmem:[#allocation3] sm:$0xff]
      %1491 = vrot.lane.b32.xlu0 %v1489, 126
      %v1492 = vpop.permute.xlu0 %1491
      %1494 = vst.msk [vmem:[#allocation5 + $0x10] sm:$0xff] %vm338, %v1492
      %v1495 = vld [vmem:[#allocation3] sm:$0xff]
      %1497 = vrot.lane.b32.xlu0 %v1495, 118
      %v1498 = vpop.permute.xlu0 %1497
      %1500 = vst.msk [vmem:[#allocation5 + $0x18] sm:$0xff] %vm338, %v1498
      %v1501 = vld [vmem:[#allocation3] sm:$0xff]
      %1503 = vrot.lane.b32.xlu0 %v1501, 117
      %v1504 = vpop.permute.xlu0 %1503
      %1506 = vst.msk [vmem:[#allocation5 + $0x20] sm:$0xff] %vm338, %v1504
      %v1507 = vld [vmem:[#allocation3] sm:$0xff]
      %1509 = vrot.lane.b32.xlu0 %v1507, 116
      %v1510 = vpop.permute.xlu0 %1509
      %1512 = vst.msk [vmem:[#allocation5 + $0x28] sm:$0xff] %vm338, %v1510
      %v1513 = vld [vmem:[#allocation3] sm:$0xff]
      %1515 = vrot.lane.b32.xlu0 %v1513, 108
      %v1516 = vpop.permute.xlu0 %1515
      %1518 = vst.msk [vmem:[#allocation5 + $0x30] sm:$0xff] %vm338, %v1516
      %v1519 = vld [vmem:[#allocation3] sm:$0xff]
      %1521 = vrot.lane.b32.xlu0 %v1519, 107
      %v1522 = vpop.permute.xlu0 %1521
      %1524 = vst.msk [vmem:[#allocation5 + $0x38] sm:$0xff] %vm338, %v1522
      %v1525 = vld [vmem:[#allocation3] sm:$0xff]
      %1527 = vrot.lane.b32.xlu0 %v1525, 106
      %v1528 = vpop.permute.xlu0 %1527
      %1530 = vst.msk [vmem:[#allocation5 + $0x40] sm:$0xff] %vm338, %v1528
      %v1531 = vld [vmem:[#allocation5] sm:$0xff]
      %v1532 = vld [vmem:[#allocation5 + $0x8] sm:$0xff]
      %v1533 = vld [vmem:[#allocation5 + $0x10] sm:$0xff]
      %v1534 = vld [vmem:[#allocation5 + $0x18] sm:$0xff]
      %v1535 = vld [vmem:[#allocation5 + $0x20] sm:$0xff]
      %v1536 = vld [vmem:[#allocation5 + $0x28] sm:$0xff]
      %v1537 = vld [vmem:[#allocation5 + $0x30] sm:$0xff]
      %v1538 = vld [vmem:[#allocation5 + $0x38] sm:$0xff]
      %v1539 = vld [vmem:[#allocation5 + $0x40] sm:$0xff]
      %v1541 = vsel %vm640, %v1470, 0
      %1543 = vmatprep.subr.mxu0 0.0
      %1544 = vmatpush1.msra.mxu0 %v1531
      %1545 = vmatprep.subr.mxu0 0.0
      %1546 = vmatpush1.msra.mxu0 %v1532
      %1547 = vmatprep.subr.mxu0 0.0
      %1548 = vmatpush1.msra.mxu0 %v1533
      %1549 = vmatprep.subr.mxu0 0.0
      %1550 = vmatpush1.msra.mxu0 %v1534
      %1551 = vmatprep.subr.mxu0 0.0
      %1552 = vmatpush1.msra.mxu0 %v1535
      %1553 = vmatprep.subr.mxu0 0.0
      %1554 = vmatpush1.msra.mxu0 %v1536
      %1555 = vmatprep.subr.mxu0 0.0
      %1556 = vmatpush1.msra.mxu0 %v1537
      %1557 = vmatprep.subr.mxu0 0.0
      %1558 = vmatpush1.msra.mxu0 %v1538
      %1559 = vmatprep.subr.mxu0 0.0
      %1560 = vmatpush1.msra.mxu0 %v1539
      %1561 = vmatprep.subr.mxu0 0.0
      %1562 = vmatpush1.msra.mxu0 0.0
      %1563 = vmatprep.subr.mxu0 0.0
      %1564 = vmatpush1.msra.mxu0 0.0
      %1565 = vmatprep.subr.mxu0 0.0
      %1566 = vmatpush1.msra.mxu0 0.0
      %1567 = vmatprep.subr.mxu0 0.0
      %1568 = vmatpush1.msra.mxu0 0.0
      %1569 = vmatprep.subr.mxu0 0.0
      %1570 = vmatpush1.msra.mxu0 0.0
      %1571 = vmatprep.subr.mxu0 0.0
      %1572 = vmatpush1.msra.mxu0 0.0
      %1573 = vmatprep.subr.mxu0 0.0
      %1574 = vmatpush1.msra.mxu0 0.0
      %1575 = vmatprep.subr.mxu0 0.0
      %1576 = vmatpush1.msra.mxu0 0.0
      %1577 = vmatprep.subr.mxu0 0.0
      %1578 = vmatpush1.msra.mxu0 0.0
      %1579 = vmatprep.subr.mxu0 0.0
      %1580 = vmatpush1.msra.mxu0 0.0
      %1581 = vmatprep.subr.mxu0 0.0
      %1582 = vmatpush1.msra.mxu0 0.0
      %1583 = vmatprep.subr.mxu0 0.0
      %1584 = vmatpush1.msra.mxu0 0.0
      %1585 = vmatprep.subr.mxu0 0.0
      %1586 = vmatpush1.msra.mxu0 0.0
      %1587 = vmatprep.subr.mxu0 0.0
      %1588 = vmatpush1.msra.mxu0 0.0
      %1589 = vmatprep.subr.mxu0 0.0
      %1590 = vmatpush1.msra.mxu0 0.0
      %1591 = vmatprep.subr.mxu0 0.0
      %1592 = vmatpush1.msra.mxu0 0.0
      %1593 = vmatprep.subr.mxu0 0.0
      %1594 = vmatpush1.msra.mxu0 0.0
      %1595 = vmatprep.subr.mxu0 0.0
      %1596 = vmatpush1.msra.mxu0 0.0
      %1597 = vmatprep.subr.mxu0 0.0
      %1598 = vmatpush1.msra.mxu0 0.0
      %1599 = vmatprep.subr.mxu0 0.0
      %1600 = vmatpush1.msra.mxu0 0.0
      %1601 = vmatprep.subr.mxu0 0.0
      %1602 = vmatpush1.msra.mxu0 0.0
      %1603 = vmatprep.subr.mxu0 0.0
      %1604 = vmatpush1.msra.mxu0 0.0
      %1605 = vmatprep.subr.mxu0 0.0
      %1606 = vmatpush1.msra.mxu0 0.0
      %1607 = vmatprep.mubr.f32.mxu0 0.0
      %1608 = vmatmul.mubr.f32.gmra.mrb[0].mxu0 %v1541
      %v1609 = vpop.f32.mrb[0].mxu0
      %v1610 = vadd.f32 0.0, %v1609
      %v1611 = vpop.f32.mrb[0].mxu0
      %1612 = vdwg.mxu0
      %1614 = vset.pattern.permute.xlu0 0
      %1615 = vperm.xlu0 %1614, %v1472
      %v1616 = vpop.permute.xlu0 %1615
      %v1618 = vmul.f32 %v1610, %v1616
      %1620 = vset.pattern.permute.xlu0 0
      %1621 = vperm.xlu0 %1620, %v1474
      %v1622 = vpop.permute.xlu0 %1621
      %v1624 = vadd.f32 %v1618, %v1622
      %v1625 = vsel %vm1309, %v1624, 0.0
      %s1626 = scalar_lea.vmem %s2, 24
      %v1627 = vld [vmem:[%s1626] sm:$0xff]
      %s1628 = scalar_lea.vmem %s3, 32
      %v1629 = vld [vmem:[%s1628] sm:$0xff]
      %s1630 = scalar_lea.vmem %s4, 32
      %v1631 = vld [vmem:[%s1630] sm:$0xff]
      %v1632 = vmax.f32 %v1625, 0.0
      %1634 = vrot.lane.b32.xlu0 %v1632, 11
      %v1635 = vpop.permute.xlu0 %1634
      %1637 = vst.msk [vmem:[#allocation3] sm:$0xff] %vm1158, %v1635
      %v1638 = vld [vmem:[#allocation3] sm:$0xff]
      %1639 = vst.msk [vmem:[#allocation5] sm:$0xff] %vm338, %v1638
      %v1640 = vld [vmem:[#allocation3] sm:$0xff]
      %1642 = vrot.lane.b32.xlu0 %v1640, 127
      %v1643 = vpop.permute.xlu0 %1642
      %1645 = vst.msk [vmem:[#allocation5 + $0x8] sm:$0xff] %vm338, %v1643
      %v1646 = vld [vmem:[#allocation3] sm:$0xff]
      %1648 = vrot.lane.b32.xlu0 %v1646, 126
      %v1649 = vpop.permute.xlu0 %1648
      %1651 = vst.msk [vmem:[#allocation5 + $0x10] sm:$0xff] %vm338, %v1649
      %v1652 = vld [vmem:[#allocation3] sm:$0xff]
      %1654 = vrot.lane.b32.xlu0 %v1652, 118
      %v1655 = vpop.permute.xlu0 %1654
      %1657 = vst.msk [vmem:[#allocation5 + $0x18] sm:$0xff] %vm338, %v1655
      %v1658 = vld [vmem:[#allocation3] sm:$0xff]
      %1660 = vrot.lane.b32.xlu0 %v1658, 117
      %v1661 = vpop.permute.xlu0 %1660
      %1663 = vst.msk [vmem:[#allocation5 + $0x20] sm:$0xff] %vm338, %v1661
      %v1664 = vld [vmem:[#allocation3] sm:$0xff]
      %1666 = vrot.lane.b32.xlu0 %v1664, 116
      %v1667 = vpop.permute.xlu0 %1666
      %1669 = vst.msk [vmem:[#allocation5 + $0x28] sm:$0xff] %vm338, %v1667
      %v1670 = vld [vmem:[#allocation3] sm:$0xff]
      %1672 = vrot.lane.b32.xlu0 %v1670, 108
      %v1673 = vpop.permute.xlu0 %1672
      %1675 = vst.msk [vmem:[#allocation5 + $0x30] sm:$0xff] %vm338, %v1673
      %v1676 = vld [vmem:[#allocation3] sm:$0xff]
      %1678 = vrot.lane.b32.xlu0 %v1676, 107
      %v1679 = vpop.permute.xlu0 %1678
      %1681 = vst.msk [vmem:[#allocation5 + $0x38] sm:$0xff] %vm338, %v1679
      %v1682 = vld [vmem:[#allocation3] sm:$0xff]
      %1684 = vrot.lane.b32.xlu0 %v1682, 106
      %v1685 = vpop.permute.xlu0 %1684
      %1687 = vst.msk [vmem:[#allocation5 + $0x40] sm:$0xff] %vm338, %v1685
      %v1688 = vld [vmem:[#allocation5] sm:$0xff]
      %v1689 = vld [vmem:[#allocation5 + $0x8] sm:$0xff]
      %v1690 = vld [vmem:[#allocation5 + $0x10] sm:$0xff]
      %v1691 = vld [vmem:[#allocation5 + $0x18] sm:$0xff]
      %v1692 = vld [vmem:[#allocation5 + $0x20] sm:$0xff]
      %v1693 = vld [vmem:[#allocation5 + $0x28] sm:$0xff]
      %v1694 = vld [vmem:[#allocation5 + $0x30] sm:$0xff]
      %v1695 = vld [vmem:[#allocation5 + $0x38] sm:$0xff]
      %v1696 = vld [vmem:[#allocation5 + $0x40] sm:$0xff]
      %v1698 = vsel %vm640, %v1627, 0
      %1700 = vmatprep.subr.mxu0 0.0
      %1701 = vmatpush1.msra.mxu0 %v1688
      %1702 = vmatprep.subr.mxu0 0.0
      %1703 = vmatpush1.msra.mxu0 %v1689
      %1704 = vmatprep.subr.mxu0 0.0
      %1705 = vmatpush1.msra.mxu0 %v1690
      %1706 = vmatprep.subr.mxu0 0.0
      %1707 = vmatpush1.msra.mxu0 %v1691
      %1708 = vmatprep.subr.mxu0 0.0
      %1709 = vmatpush1.msra.mxu0 %v1692
      %1710 = vmatprep.subr.mxu0 0.0
      %1711 = vmatpush1.msra.mxu0 %v1693
      %1712 = vmatprep.subr.mxu0 0.0
      %1713 = vmatpush1.msra.mxu0 %v1694
      %1714 = vmatprep.subr.mxu0 0.0
      %1715 = vmatpush1.msra.mxu0 %v1695
      %1716 = vmatprep.subr.mxu0 0.0
      %1717 = vmatpush1.msra.mxu0 %v1696
      %1718 = vmatprep.subr.mxu0 0.0
      %1719 = vmatpush1.msra.mxu0 0.0
      %1720 = vmatprep.subr.mxu0 0.0
      %1721 = vmatpush1.msra.mxu0 0.0
      %1722 = vmatprep.subr.mxu0 0.0
      %1723 = vmatpush1.msra.mxu0 0.0
      %1724 = vmatprep.subr.mxu0 0.0
      %1725 = vmatpush1.msra.mxu0 0.0
      %1726 = vmatprep.subr.mxu0 0.0
      %1727 = vmatpush1.msra.mxu0 0.0
      %1728 = vmatprep.subr.mxu0 0.0
      %1729 = vmatpush1.msra.mxu0 0.0
      %1730 = vmatprep.subr.mxu0 0.0
      %1731 = vmatpush1.msra.mxu0 0.0
      %1732 = vmatprep.subr.mxu0 0.0
      %1733 = vmatpush1.msra.mxu0 0.0
      %1734 = vmatprep.subr.mxu0 0.0
      %1735 = vmatpush1.msra.mxu0 0.0
      %1736 = vmatprep.subr.mxu0 0.0
      %1737 = vmatpush1.msra.mxu0 0.0
      %1738 = vmatprep.subr.mxu0 0.0
      %1739 = vmatpush1.msra.mxu0 0.0
      %1740 = vmatprep.subr.mxu0 0.0
      %1741 = vmatpush1.msra.mxu0 0.0
      %1742 = vmatprep.subr.mxu0 0.0
      %1743 = vmatpush1.msra.mxu0 0.0
      %1744 = vmatprep.subr.mxu0 0.0
      %1745 = vmatpush1.msra.mxu0 0.0
      %1746 = vmatprep.subr.mxu0 0.0
      %1747 = vmatpush1.msra.mxu0 0.0
      %1748 = vmatprep.subr.mxu0 0.0
      %1749 = vmatpush1.msra.mxu0 0.0
      %1750 = vmatprep.subr.mxu0 0.0
      %1751 = vmatpush1.msra.mxu0 0.0
      %1752 = vmatprep.subr.mxu0 0.0
      %1753 = vmatpush1.msra.mxu0 0.0
      %1754 = vmatprep.subr.mxu0 0.0
      %1755 = vmatpush1.msra.mxu0 0.0
      %1756 = vmatprep.subr.mxu0 0.0
      %1757 = vmatpush1.msra.mxu0 0.0
      %1758 = vmatprep.subr.mxu0 0.0
      %1759 = vmatpush1.msra.mxu0 0.0
      %1760 = vmatprep.subr.mxu0 0.0
      %1761 = vmatpush1.msra.mxu0 0.0
      %1762 = vmatprep.subr.mxu0 0.0
      %1763 = vmatpush1.msra.mxu0 0.0
      %1764 = vmatprep.mubr.f32.mxu0 0.0
      %1765 = vmatmul.mubr.f32.gmra.mrb[0].mxu0 %v1698
      %v1766 = vpop.f32.mrb[0].mxu0
      %v1767 = vadd.f32 0.0, %v1766
      %v1768 = vpop.f32.mrb[0].mxu0
      %1769 = vdwg.mxu0
      %1771 = vset.pattern.permute.xlu0 0
      %1772 = vperm.xlu0 %1771, %v1629
      %v1773 = vpop.permute.xlu0 %1772
      %v1775 = vmul.f32 %v1767, %v1773
      %1777 = vset.pattern.permute.xlu0 0
      %1778 = vperm.xlu0 %1777, %v1631
      %v1779 = vpop.permute.xlu0 %1778
      %v1781 = vadd.f32 %v1775, %v1779
      %v1782 = vsel %vm1309, %v1781, 0.0
      %v1783 = vadd.f32 %v1782, %v1468
      %1785 = vrot.lane.b32.xlu0 %v1783, 117
      %v1786 = vpop.permute.xlu0 %1785
      %vm1788 = vcmask 64512
      %1789 = vst.msk [vmem:[%s303] sm:$0xff] %vm1788, %v1786
      %1790 = vrot.lane.b32.xlu0 %v1783, 115
      %v1791 = vpop.permute.xlu0 %1790
      %vm1793 = vcmask 130112
      %1794 = vst.msk [vmem:[%s303] sm:$0xff] %vm1793, %v1791
      %1795 = vrot.lane.b32.xlu0 %v1783, 113
      %v1796 = vpop.permute.xlu0 %1795
      %vm1798 = vcmask 195712
      %1799 = vst.msk [vmem:[%s303] sm:$0xff] %vm1798, %v1796
      %1800 = vrot.lane.b32.xlu0 %v1783, 111
      %v1801 = vpop.permute.xlu0 %1800
      %vm1803 = vcmask 261312
      %1804 = vst.msk [vmem:[%s303] sm:$0xff] %vm1803, %v1801
      %1805 = vrot.lane.b32.xlu0 %v1783, 109
      %v1806 = vpop.permute.xlu0 %1805
      %vm1808 = vcmask 326912
      %1809 = vst.msk [vmem:[%s303] sm:$0xff] %vm1808, %v1806
      %1810 = vrot.lane.b32.xlu0 %v1783, 107
      %v1811 = vpop.permute.xlu0 %1810
      %vm1813 = vcmask 392512
      %1814 = vst.msk [vmem:[%s303] sm:$0xff] %vm1813, %v1811
      %1815 = vrot.lane.b32.xlu0 %v1783, 105
      %v1816 = vpop.permute.xlu0 %1815
      %vm1818 = vcmask 458112
      %1819 = vst.msk [vmem:[%s303] sm:$0xff] %vm1818, %v1816
      %1820 = vrot.lane.b32.xlu0 %v1783, 103
      %v1821 = vpop.permute.xlu0 %1820
      %vm1823 = vcmask 523712
      %1824 = vst.msk [vmem:[%s303] sm:$0xff] %vm1823, %v1821
      %p1825 = scmp.lt.s32.totalorder %s19, 1
      %s1826 = scalar_select %p1825, %s19, 1
      %s1827 = smul.addr %s1826, 8
      %s1828 = scalar_lea.vmem %s8, %s1827
      // Predicated region
      $region53: #{conv_sequence_forward.1} parent=51 // pred_check
        %p1829 = pneg %p210
      $region54: #{conv_sequence_forward.1} parent=51 // pred_check_branch
        %1831 = sbr.rel (%p1829) target = $region56
      $region55: #{conv_sequence_forward.1} parent=51 // pred_region
        _
      $region56: #{conv_sequence_forward.1} parent=51 // pred_fallthru
        _
    $region52: #{conv_sequence_forward.1} parent=5 // pred_fallthru
      _
    %p1832 = scmp.le.s32.totalorder 2, %s14
    // Predicated region
    $region57: #{conv_sequence_forward.1} parent=5 // pred_check
      %p1833 = pneg %p1832
    $region58: #{conv_sequence_forward.1} parent=5 // pred_check_branch
      %1835 = sbr.rel (%p1833) target = $region60
    $region59: #{conv_sequence_forward.1} parent=5 // pred_region
      %s1836 = ssub.s32 %s14, 2
      // Predicated region
      $region61: #{conv_sequence_forward.1} parent=59 // pred_check
        %p1837 = pneg %p216
      $region62: #{conv_sequence_forward.1} parent=59 // pred_check_branch
        %1839 = sbr.rel (%p1837) target = $region64
      $region63: #{conv_sequence_forward.1} parent=59 // pred_region
        %p1840 = scmp.lt.s32.totalorder %s20, 1
        %s1841 = scalar_select %p1840, %s20, 1
        %s1842 = smul.addr %s1841, 8
        %s1843 = scalar_lea.vmem %s8, %s1842
      $region64: #{conv_sequence_forward.1} parent=59 // pred_fallthru
        _
    $region60: #{conv_sequence_forward.1} parent=5 // pred_fallthru
      _
  $region6: #{conv_sequence_forward.1} parent=0 // loop_footer
    %s18 = sadd.s32 1, %s14
  $region7: #{conv_sequence_forward.1} parent=0 // loop_footer_branch
    %13 = sbr.rel target = $region3
  $region8: #{conv_sequence_forward.1} parent=0 // loop_exit
    _

</llo_original>
